<compile_context>
chip_gen: v7x
topology: tpu7x:2x2x1
jax: 0.10.0
libtpu: 0.0.40
codegen_flags: <defaults>
</compile_context>

<pallas_src>
import jax
import jax.numpy as jnp
from jax import lax
from jax.experimental import pallas as pl
from jax.experimental.pallas import tpu as pltpu

# ----------------------------- config ---------------------------------------
B = 16            # batch (16*8 = 128 flattened rows per call)
T = 8             # sequence length (== block_size)
C = 32            # n_embd
N_HEADS = 4
HEAD = C // N_HEADS
HID = 4 * C       # FFN hidden (=128, lane-dense)
BT = B * T        # flattened rows (=128)
TM = 64           # rows per grid step (multiple of T; 2 steps -> both v7x TCs)
AW = N_HEADS * TM # wide attention columns: head-major blocks of TM keys (=256)
EPS = 1e-5
SCALE = C ** (-0.5)   # reference scales by n_embd**-0.5 (NOT head_size) — reproduce


# ----------------------------- kernel ---------------------------------------
def _layer_norm(h, g, b):
    mu = jnp.mean(h, axis=-1, keepdims=True)
    d = h - mu
    var = jnp.mean(d * d, axis=-1, keepdims=True)
    return d * lax.rsqrt(var + EPS) * g + b


def block_kernel(x_ref, wq_ref, wk_ref, wv_ref, wproj_ref, w1_ref, w2_ref,
                 vecc_ref, b1_ref, kvmask_ref, bias_ref, out_ref):
    x = x_ref[...]                                   # (TM, C) f32 rows of this tile
    vecc = vecc_ref[...]                             # (6, C): ln1_g, ln1_b, b_proj, ln2_g, ln2_b, b2

    # ---- LN1 (f32) ----
    h = _layer_norm(x, vecc[0:1, :], vecc[1:2, :])
    h_bf = h.astype(jnp.bfloat16)

    # ---- Q, K, V: three dots, no lane slicing; SCALE pre-folded into Wq ----
    q = jnp.dot(h_bf, wq_ref[...], preferred_element_type=jnp.float32).astype(jnp.bfloat16)
    k = jnp.dot(h_bf, wk_ref[...], preferred_element_type=jnp.float32).astype(jnp.bfloat16)
    v = jnp.dot(h_bf, wv_ref[...], preferred_element_type=jnp.float32).astype(jnp.bfloat16)

    # ---- block-diagonal expansion with a precomputed 0/1 mask ----
    # Wide row m = head*TM + key-row; kv_mask[m, c] = 1 iff channel c belongs to head m//TM.
    kv_mask = kvmask_ref[...]                                    # (AW, C) bf16
    k_bd = jnp.concatenate([k] * N_HEADS, axis=0) * kv_mask      # (AW, C)
    v_bd = jnp.concatenate([v] * N_HEADS, axis=0) * kv_mask      # (AW, C)

    # ---- scores: contract last dims (no explicit transpose), f32 accumulate ----
    s = lax.dot_general(q, k_bd, (((1,), (1,)), ((), ())),
                        preferred_element_type=jnp.float32)      # (TM, AW)
    s = s + bias_ref[...]                            # additive 0 / -1e30 batch+causal mask

    # Softmax, per-row global max (the diagonal is always unmasked -> finite max).
    # TODO(synk): a per-head-segment max would be more robust for trained weights with
    # widely differing per-head logit ranges; den is clamped below to avoid inf/NaN.
    s = s - jnp.max(s, axis=-1, keepdims=True)
    p = jnp.exp(s).astype(jnp.bfloat16)              # masked entries -> 0

    # Unnormalized per-head outputs, concatenated along lanes by v_bd.
    o_un = jnp.dot(p, v_bd, preferred_element_type=jnp.float32)     # (TM, C)
    # Per-(row, head) denominator, already broadcast to that head's channels,
    # via a matmul with the same 0/1 mask (MXU, not VPU).
    den = jnp.dot(p, kv_mask, preferred_element_type=jnp.float32)   # (TM, C)
    att = o_un * pl.reciprocal(jnp.maximum(den, 1e-30), approx=True)

    # ---- output projection + residual 1 ----
    att = jnp.dot(att.astype(jnp.bfloat16), wproj_ref[...],
                  preferred_element_type=jnp.float32) + vecc[2:3, :]
    x1 = x + att
    # TODO(synk): dropout layers are identity at inference and omitted.

    # ---- LN2 + FeedForward + residual 2 ----
    h2 = _layer_norm(x1, vecc[3:4, :], vecc[4:5, :]).astype(jnp.bfloat16)
    ff = jnp.dot(h2, w1_ref[...], preferred_element_type=jnp.float32) + b1_ref[...]
    ff = jnp.maximum(ff, 0.0).astype(jnp.bfloat16)
    ff = jnp.dot(ff, w2_ref[...], preferred_element_type=jnp.float32) + vecc[5:6, :]

    out_ref[...] = x1 + ff


# ----------------------------- wrapper ---------------------------------------
def pack_params(params):
    """One-time host-side fold: bf16 weights, scale fold, constant masks."""
    (ln1_g, ln1_b, wq, wk, wv, wproj, bproj,
     ln2_g, ln2_b, w1, b1, w2, b2) = params
    bf = jnp.bfloat16
    wq_s = (wq * SCALE).astype(bf)        # fold n_embd**-0.5 into Wq
    weights = (wq_s, wk.astype(bf), wv.astype(bf), wproj.astype(bf),
               w1.astype(bf), w2.astype(bf))
    vecc = jnp.concatenate([ln1_g, ln1_b, bproj, ln2_g, ln2_b, b2], axis=0)  # (6, C) f32

    # Compile-time-constant selectors (built once here, never in-kernel).
    m = jnp.arange(AW)                    # wide index = head*TM + key-row-in-tile
    c = jnp.arange(C)
    i = jnp.arange(TM)
    kv_mask = ((c[None, :] // HEAD) == (m[:, None] // TM)).astype(bf)        # (AW, C)
    j = m % TM
    valid = ((j[None, :] // T) == (i[:, None] // T)) & \
            ((j[None, :] % T) <= (i[:, None] % T))
    attn_bias = jnp.where(valid, 0.0, -1e30).astype(jnp.float32)             # (TM, AW)
    return weights + (vecc, b1, kv_mask, attn_bias)


@jax.jit
def block_forward(x, packed):
    (wq_s, wk_b, wv_b, wproj_b, w1_b, w2_b, vecc, b1, kv_mask, attn_bias) = packed
    x2 = x.reshape(BT, C)                 # free metadata reshape in XLA

    row_spec = pl.BlockSpec((TM, C), lambda i: (i, 0))

    def const_spec(a):                    # same (full) block every grid step
        return pl.BlockSpec(a.shape, lambda i: (0, 0))

    out = pl.pallas_call(
        block_kernel,
        out_shape=jax.ShapeDtypeStruct((BT, C), jnp.float32),
        grid=(BT // TM,),
        in_specs=[row_spec,
                  const_spec(wq_s), const_spec(wk_b), const_spec(wv_b),
                  const_spec(wproj_b), const_spec(w1_b), const_spec(w2_b),
                  const_spec(vecc), const_spec(b1),
                  const_spec(kv_mask), const_spec(attn_bias)],
        out_specs=row_spec,
        compiler_params=pltpu.CompilerParams(
            dimension_semantics=("parallel",)),   # shard row tiles over v7x's 2 TCs
    )(x2, wq_s, wk_b, wv_b, wproj_b, w1_b, w2_b, vecc, b1, kv_mask, attn_bias)
    return out.reshape(B, T, C)


# --------------------------- pure-JAX reference -------------------------------
def block_reference(x, params):
    (ln1_g, ln1_b, wq, wk, wv, wproj, bproj,
     ln2_g, ln2_b, w1, b1, w2, b2) = params

    def ln(h, g, b):
        mu = jnp.mean(h, axis=-1, keepdims=True)
        var = jnp.mean((h - mu) ** 2, axis=-1, keepdims=True)
        return (h - mu) / jnp.sqrt(var + EPS) * g + b

    h = ln(x, ln1_g[0], ln1_b[0])
    q = h @ wq
    k = h @ wk
    v = h @ wv
    q = q.reshape(B, T, N_HEADS, HEAD).transpose(0, 2, 1, 3)
    k = k.reshape(B, T, N_HEADS, HEAD).transpose(0, 2, 1, 3)
    v = v.reshape(B, T, N_HEADS, HEAD).transpose(0, 2, 1, 3)
    wei = jnp.einsum("bhqd,bhkd->bhqk", q, k) * (C ** -0.5)
    mask = jnp.tril(jnp.ones((T, T), bool))
    wei = jnp.where(mask, wei, -jnp.inf)
    wei = jax.nn.softmax(wei, axis=-1)
    att = jnp.einsum("bhqk,bhkd->bhqd", wei, v).transpose(0, 2, 1, 3).reshape(B, T, C)
    att = att @ wproj + bproj[0]
    x1 = x + att
    h2 = ln(x1, ln2_g[0], ln2_b[0])
    ff = jnp.maximum(h2 @ w1 + b1[0], 0.0) @ w2 + b2[0]
    return x1 + ff


# ----------------------------- main -------------------------------------------
if __name__ == "__main__":
    key = jax.random.PRNGKey(0)
    keys = jax.random.split(key, 8)

    x = jax.random.normal(keys[0], (B, T, C), jnp.float32)

    scale = 0.02
    params = (
        jnp.ones((1, C), jnp.float32),                              # ln1 gamma
        jnp.zeros((1, C), jnp.float32),                             # ln1 beta
        jax.random.normal(keys[1], (C, C), jnp.float32) * scale,    # Wq (heads on out dim)
        jax.random.normal(keys[2], (C, C), jnp.float32) * scale,    # Wk
        jax.random.normal(keys[3], (C, C), jnp.float32) * scale,    # Wv
        jax.random.normal(keys[4], (C, C), jnp.float32) * scale,    # proj W
        jnp.zeros((1, C), jnp.float32),                             # proj b
        jnp.ones((1, C), jnp.float32),                              # ln2 gamma
        jnp.zeros((1, C), jnp.float32),                             # ln2 beta
        jax.random.normal(keys[5], (C, HID), jnp.float32) * scale,  # FFN W1
        jnp.zeros((1, HID), jnp.float32),                           # FFN b1
        jax.random.normal(keys[6], (HID, C), jnp.float32) * scale,  # FFN W2
        jnp.zeros((1, C), jnp.float32),                             # FFN b2
    )

    packed = pack_params(params)

    out = block_forward(x, packed)
    jax.block_until_ready(out)

    ref = block_reference(x, params)
    assert out.shape == (B, T, C)
    # bf16 matmul operands (f32 accumulate) vs f32 reference -> ~1e-3 abs error.
    assert jnp.allclose(out, ref, atol=2e-2, rtol=2e-2), \
        f"max err {jnp.max(jnp.abs(out - ref))}"

    print("KERNEL_OK")
</pallas_src>

<mosaic_0001>
module attributes {stable_mosaic.version = 11 : i64} {
  func.func @block_kernel(%arg0: i32, %arg1: memref<64x32xf32, #tpu.memory_space<vmem>>, %arg2: memref<32x32xbf16, #tpu.memory_space<vmem>>, %arg3: memref<32x32xbf16, #tpu.memory_space<vmem>>, %arg4: memref<32x32xbf16, #tpu.memory_space<vmem>>, %arg5: memref<32x32xbf16, #tpu.memory_space<vmem>>, %arg6: memref<32x128xbf16, #tpu.memory_space<vmem>>, %arg7: memref<128x32xbf16, #tpu.memory_space<vmem>>, %arg8: memref<6x32xf32, #tpu.memory_space<vmem>>, %arg9: memref<1x128xf32, #tpu.memory_space<vmem>>, %arg10: memref<256x32xbf16, #tpu.memory_space<vmem>>, %arg11: memref<64x256xf32, #tpu.memory_space<vmem>>, %arg12: memref<64x32xf32, #tpu.memory_space<vmem>>) attributes {dimension_semantics = [#tpu.dimension_semantics<parallel>], iteration_bounds = array<i64: 2>, scalar_prefetch = 0 : i64, scratch_operands = 0 : i64, tpu.core_type = #tpu.core_type<tc>, window_params = [{transform_indices = @transform_0, window_bounds = array<i64: 64, 32>}, {pipeline_mode = #tpu.pipeline_mode<synchronous>, transform_indices = @transform_1, window_bounds = array<i64: 32, 32>}, {pipeline_mode = #tpu.pipeline_mode<synchronous>, transform_indices = @transform_2, window_bounds = array<i64: 32, 32>}, {pipeline_mode = #tpu.pipeline_mode<synchronous>, transform_indices = @transform_3, window_bounds = array<i64: 32, 32>}, {pipeline_mode = #tpu.pipeline_mode<synchronous>, transform_indices = @transform_4, window_bounds = array<i64: 32, 32>}, {pipeline_mode = #tpu.pipeline_mode<synchronous>, transform_indices = @transform_5, window_bounds = array<i64: 32, 128>}, {pipeline_mode = #tpu.pipeline_mode<synchronous>, transform_indices = @transform_6, window_bounds = array<i64: 128, 32>}, {pipeline_mode = #tpu.pipeline_mode<synchronous>, transform_indices = @transform_7, window_bounds = array<i64: 6, 32>}, {pipeline_mode = #tpu.pipeline_mode<synchronous>, transform_indices = @transform_8, window_bounds = array<i64: 1, 128>}, {pipeline_mode = #tpu.pipeline_mode<synchronous>, transform_indices = @transform_9, window_bounds = array<i64: 256, 32>}, {pipeline_mode = #tpu.pipeline_mode<synchronous>, transform_indices = @transform_10, window_bounds = array<i64: 64, 256>}, {transform_indices = @transform_11, window_bounds = array<i64: 64, 32>}]} {
    %c0 = arith.constant 0 : index
    %c0_0 = arith.constant 0 : index
    %0 = vector.load %arg1[%c0, %c0_0] : memref<64x32xf32, #tpu.memory_space<vmem>>, vector<64x32xf32>
    %c0_1 = arith.constant 0 : index
    %c0_2 = arith.constant 0 : index
    %1 = vector.load %arg8[%c0_1, %c0_2] : memref<6x32xf32, #tpu.memory_space<vmem>>, vector<6x32xf32>
    %2 = vector.extract_strided_slice %1 {offsets = [0, 0], sizes = [1, 32], strides = [1, 1]} : vector<6x32xf32> to vector<1x32xf32>
    %3 = vector.extract_strided_slice %1 {offsets = [1, 0], sizes = [1, 32], strides = [1, 1]} : vector<6x32xf32> to vector<1x32xf32>
    %cst = arith.constant dense<0.000000e+00> : vector<64xf32>
    %4 = vector.multi_reduction <add>, %0, %cst [1] : vector<64x32xf32> to vector<64xf32>
    %5 = vector.shape_cast %4 : vector<64xf32> to vector<64x1xf32>
    %cst_3 = arith.constant 3.200000e+01 : f32
    %6 = vector.broadcast %cst_3 : f32 to vector<64x1xf32>
    %7 = arith.divf %5, %6 : vector<64x1xf32>
    %8 = vector.broadcast %7 : vector<64x1xf32> to vector<64x32xf32>
    %9 = arith.subf %0, %8 : vector<64x32xf32>
    %10 = arith.mulf %9, %9 : vector<64x32xf32>
    %cst_4 = arith.constant dense<0.000000e+00> : vector<64xf32>
    %11 = vector.multi_reduction <add>, %10, %cst_4 [1] : vector<64x32xf32> to vector<64xf32>
    %12 = vector.shape_cast %11 : vector<64xf32> to vector<64x1xf32>
    %cst_5 = arith.constant 3.200000e+01 : f32
    %13 = vector.broadcast %cst_5 : f32 to vector<64x1xf32>
    %14 = arith.divf %12, %13 : vector<64x1xf32>
    %cst_6 = arith.constant 9.99999974E-6 : f32
    %15 = vector.broadcast %cst_6 : f32 to vector<64x1xf32>
    %16 = arith.addf %14, %15 : vector<64x1xf32>
    %17 = math.rsqrt %16 : vector<64x1xf32>
    %18 = vector.broadcast %17 : vector<64x1xf32> to vector<64x32xf32>
    %19 = arith.mulf %9, %18 : vector<64x32xf32>
    %20 = vector.broadcast %2 : vector<1x32xf32> to vector<64x32xf32>
    %21 = arith.mulf %19, %20 : vector<64x32xf32>
    %22 = vector.broadcast %3 : vector<1x32xf32> to vector<64x32xf32>
    %23 = arith.addf %21, %22 : vector<64x32xf32>
    %24 = arith.truncf %23 : vector<64x32xf32> to vector<64x32xbf16>
    %c0_7 = arith.constant 0 : index
    %c0_8 = arith.constant 0 : index
    %25 = vector.load %arg2[%c0_7, %c0_8] : memref<32x32xbf16, #tpu.memory_space<vmem>>, vector<32x32xbf16>
    %cst_9 = arith.constant dense<0.000000e+00> : vector<64x32xf32>
    %26 = tpu.matmul %24, %25, %cst_9 {dimension_numbers = #tpu.dot_dimension_numbers<[1], [0], [0], [1], [0, 0, 1, 1], [], []>} : vector<64x32xbf16>, vector<32x32xbf16>, vector<64x32xf32> -> vector<64x32xf32>
    %27 = arith.truncf %26 : vector<64x32xf32> to vector<64x32xbf16>
    %c0_10 = arith.constant 0 : index
    %c0_11 = arith.constant 0 : index
    %28 = vector.load %arg3[%c0_10, %c0_11] : memref<32x32xbf16, #tpu.memory_space<vmem>>, vector<32x32xbf16>
    %cst_12 = arith.constant dense<0.000000e+00> : vector<64x32xf32>
    %29 = tpu.matmul %24, %28, %cst_12 {dimension_numbers = #tpu.dot_dimension_numbers<[1], [0], [0], [1], [0, 0, 1, 1], [], []>} : vector<64x32xbf16>, vector<32x32xbf16>, vector<64x32xf32> -> vector<64x32xf32>
    %30 = arith.truncf %29 : vector<64x32xf32> to vector<64x32xbf16>
    %c0_13 = arith.constant 0 : index
    %c0_14 = arith.constant 0 : index
    %31 = vector.load %arg4[%c0_13, %c0_14] : memref<32x32xbf16, #tpu.memory_space<vmem>>, vector<32x32xbf16>
    %cst_15 = arith.constant dense<0.000000e+00> : vector<64x32xf32>
    %32 = tpu.matmul %24, %31, %cst_15 {dimension_numbers = #tpu.dot_dimension_numbers<[1], [0], [0], [1], [0, 0, 1, 1], [], []>} : vector<64x32xbf16>, vector<32x32xbf16>, vector<64x32xf32> -> vector<64x32xf32>
    %33 = arith.truncf %32 : vector<64x32xf32> to vector<64x32xbf16>
    %c0_16 = arith.constant 0 : index
    %c0_17 = arith.constant 0 : index
    %34 = vector.load %arg10[%c0_16, %c0_17] : memref<256x32xbf16, #tpu.memory_space<vmem>>, vector<256x32xbf16>
    %35 = tpu.concatenate %30, %30, %30, %30 in 0 : vector<64x32xbf16>, vector<64x32xbf16>, vector<64x32xbf16>, vector<64x32xbf16> -> vector<256x32xbf16>
    %36 = arith.mulf %35, %34 : vector<256x32xbf16>
    %37 = tpu.concatenate %33, %33, %33, %33 in 0 : vector<64x32xbf16>, vector<64x32xbf16>, vector<64x32xbf16>, vector<64x32xbf16> -> vector<256x32xbf16>
    %38 = arith.mulf %37, %34 : vector<256x32xbf16>
    %cst_18 = arith.constant dense<0.000000e+00> : vector<64x256xf32>
    %39 = tpu.matmul %27, %36, %cst_18 {dimension_numbers = #tpu.dot_dimension_numbers<[1], [1], [0], [0], [0, 0, 1, 0], [], []>} : vector<64x32xbf16>, vector<256x32xbf16>, vector<64x256xf32> -> vector<64x256xf32>
    %c0_19 = arith.constant 0 : index
    %c0_20 = arith.constant 0 : index
    %40 = vector.load %arg11[%c0_19, %c0_20] : memref<64x256xf32, #tpu.memory_space<vmem>>, vector<64x256xf32>
    %41 = arith.addf %39, %40 : vector<64x256xf32>
    %cst_21 = arith.constant dense<0xFF800000> : vector<64xf32>
    %42 = vector.multi_reduction <maximumf>, %41, %cst_21 [1] : vector<64x256xf32> to vector<64xf32>
    %43 = vector.shape_cast %42 : vector<64xf32> to vector<64x1xf32>
    %44 = vector.broadcast %43 : vector<64x1xf32> to vector<64x256xf32>
    %45 = arith.subf %41, %44 : vector<64x256xf32>
    %46 = math.exp %45 : vector<64x256xf32>
    %47 = arith.truncf %46 : vector<64x256xf32> to vector<64x256xbf16>
    %cst_22 = arith.constant dense<0.000000e+00> : vector<64x32xf32>
    %48 = tpu.matmul %47, %38, %cst_22 {dimension_numbers = #tpu.dot_dimension_numbers<[1], [0], [0], [1], [0, 0, 1, 1], [], []>} : vector<64x256xbf16>, vector<256x32xbf16>, vector<64x32xf32> -> vector<64x32xf32>
    %cst_23 = arith.constant dense<0.000000e+00> : vector<64x32xf32>
    %49 = tpu.matmul %47, %34, %cst_23 {dimension_numbers = #tpu.dot_dimension_numbers<[1], [0], [0], [1], [0, 0, 1, 1], [], []>} : vector<64x256xbf16>, vector<256x32xbf16>, vector<64x32xf32> -> vector<64x32xf32>
    %cst_24 = arith.constant 1.000000e-30 : f32
    %50 = vector.broadcast %cst_24 : f32 to vector<64x32xf32>
    %51 = arith.maximumf %49, %50 : vector<64x32xf32>
    %52 = tpu.reciprocal %51 {approx = true} : vector<64x32xf32> -> vector<64x32xf32>
    %53 = arith.mulf %48, %52 : vector<64x32xf32>
    %54 = arith.truncf %53 : vector<64x32xf32> to vector<64x32xbf16>
    %c0_25 = arith.constant 0 : index
    %c0_26 = arith.constant 0 : index
    %55 = vector.load %arg5[%c0_25, %c0_26] : memref<32x32xbf16, #tpu.memory_space<vmem>>, vector<32x32xbf16>
    %cst_27 = arith.constant dense<0.000000e+00> : vector<64x32xf32>
    %56 = tpu.matmul %54, %55, %cst_27 {dimension_numbers = #tpu.dot_dimension_numbers<[1], [0], [0], [1], [0, 0, 1, 1], [], []>} : vector<64x32xbf16>, vector<32x32xbf16>, vector<64x32xf32> -> vector<64x32xf32>
    %57 = vector.extract_strided_slice %1 {offsets = [2, 0], sizes = [1, 32], strides = [1, 1]} : vector<6x32xf32> to vector<1x32xf32>
    %58 = vector.broadcast %57 : vector<1x32xf32> to vector<64x32xf32>
    %59 = arith.addf %56, %58 : vector<64x32xf32>
    %60 = arith.addf %0, %59 : vector<64x32xf32>
    %61 = vector.extract_strided_slice %1 {offsets = [3, 0], sizes = [1, 32], strides = [1, 1]} : vector<6x32xf32> to vector<1x32xf32>
    %62 = vector.extract_strided_slice %1 {offsets = [4, 0], sizes = [1, 32], strides = [1, 1]} : vector<6x32xf32> to vector<1x32xf32>
    %cst_28 = arith.constant dense<0.000000e+00> : vector<64xf32>
    %63 = vector.multi_reduction <add>, %60, %cst_28 [1] : vector<64x32xf32> to vector<64xf32>
    %64 = vector.shape_cast %63 : vector<64xf32> to vector<64x1xf32>
    %cst_29 = arith.constant 3.200000e+01 : f32
    %65 = vector.broadcast %cst_29 : f32 to vector<64x1xf32>
    %66 = arith.divf %64, %65 : vector<64x1xf32>
    %67 = vector.broadcast %66 : vector<64x1xf32> to vector<64x32xf32>
    %68 = arith.subf %60, %67 : vector<64x32xf32>
    %69 = arith.mulf %68, %68 : vector<64x32xf32>
    %cst_30 = arith.constant dense<0.000000e+00> : vector<64xf32>
    %70 = vector.multi_reduction <add>, %69, %cst_30 [1] : vector<64x32xf32> to vector<64xf32>
    %71 = vector.shape_cast %70 : vector<64xf32> to vector<64x1xf32>
    %cst_31 = arith.constant 3.200000e+01 : f32
    %72 = vector.broadcast %cst_31 : f32 to vector<64x1xf32>
    %73 = arith.divf %71, %72 : vector<64x1xf32>
    %cst_32 = arith.constant 9.99999974E-6 : f32
    %74 = vector.broadcast %cst_32 : f32 to vector<64x1xf32>
    %75 = arith.addf %73, %74 : vector<64x1xf32>
    %76 = math.rsqrt %75 : vector<64x1xf32>
    %77 = vector.broadcast %76 : vector<64x1xf32> to vector<64x32xf32>
    %78 = arith.mulf %68, %77 : vector<64x32xf32>
    %79 = vector.broadcast %61 : vector<1x32xf32> to vector<64x32xf32>
    %80 = arith.mulf %78, %79 : vector<64x32xf32>
    %81 = vector.broadcast %62 : vector<1x32xf32> to vector<64x32xf32>
    %82 = arith.addf %80, %81 : vector<64x32xf32>
    %83 = arith.truncf %82 : vector<64x32xf32> to vector<64x32xbf16>
    %c0_33 = arith.constant 0 : index
    %c0_34 = arith.constant 0 : index
    %84 = vector.load %arg6[%c0_33, %c0_34] : memref<32x128xbf16, #tpu.memory_space<vmem>>, vector<32x128xbf16>
    %cst_35 = arith.constant dense<0.000000e+00> : vector<64x128xf32>
    %85 = tpu.matmul %83, %84, %cst_35 {dimension_numbers = #tpu.dot_dimension_numbers<[1], [0], [0], [1], [0, 0, 1, 1], [], []>} : vector<64x32xbf16>, vector<32x128xbf16>, vector<64x128xf32> -> vector<64x128xf32>
    %c0_36 = arith.constant 0 : index
    %c0_37 = arith.constant 0 : index
    %86 = vector.load %arg9[%c0_36, %c0_37] : memref<1x128xf32, #tpu.memory_space<vmem>>, vector<1x128xf32>
    %87 = vector.broadcast %86 : vector<1x128xf32> to vector<64x128xf32>
    %88 = arith.addf %85, %87 : vector<64x128xf32>
    %cst_38 = arith.constant 0.000000e+00 : f32
    %89 = vector.broadcast %cst_38 : f32 to vector<64x128xf32>
    %90 = arith.maximumf %88, %89 : vector<64x128xf32>
    %91 = arith.truncf %90 : vector<64x128xf32> to vector<64x128xbf16>
    %c0_39 = arith.constant 0 : index
    %c0_40 = arith.constant 0 : index
    %92 = vector.load %arg7[%c0_39, %c0_40] : memref<128x32xbf16, #tpu.memory_space<vmem>>, vector<128x32xbf16>
    %cst_41 = arith.constant dense<0.000000e+00> : vector<64x32xf32>
    %93 = tpu.matmul %91, %92, %cst_41 {dimension_numbers = #tpu.dot_dimension_numbers<[1], [0], [0], [1], [0, 0, 1, 1], [], []>} : vector<64x128xbf16>, vector<128x32xbf16>, vector<64x32xf32> -> vector<64x32xf32>
    %94 = vector.extract_strided_slice %1 {offsets = [5, 0], sizes = [1, 32], strides = [1, 1]} : vector<6x32xf32> to vector<1x32xf32>
    %95 = vector.broadcast %94 : vector<1x32xf32> to vector<64x32xf32>
    %96 = arith.addf %93, %95 : vector<64x32xf32>
    %97 = arith.addf %60, %96 : vector<64x32xf32>
    %c0_42 = arith.constant 0 : index
    %c0_43 = arith.constant 0 : index
    %98 = vector.load %arg12[%c0_42, %c0_43] : memref<64x32xf32, #tpu.memory_space<vmem>>, vector<64x32xf32>
    tpu.vector_store %arg12[%c0_42, %c0_43], %97 {strides = array<i32>} : memref<64x32xf32, #tpu.memory_space<vmem>>, vector<64x32xf32>,
    return
  }
  func.func @transform_0(%arg0: i32) -> (i32, i32) {
    %c0_i32 = arith.constant 0 : i32
    %c0_i32_0 = arith.constant 0 : i32
    return %arg0, %c0_i32 : i32, i32
  }
  func.func @transform_1(%arg0: i32) -> (i32, i32) {
    %c0_i32 = arith.constant 0 : i32
    %c0_i32_0 = arith.constant 0 : i32
    %c0_i32_1 = arith.constant 0 : i32
    return %c0_i32, %c0_i32_0 : i32, i32
  }
  func.func @transform_2(%arg0: i32) -> (i32, i32) {
    %c0_i32 = arith.constant 0 : i32
    %c0_i32_0 = arith.constant 0 : i32
    %c0_i32_1 = arith.constant 0 : i32
    return %c0_i32, %c0_i32_0 : i32, i32
  }
  func.func @transform_3(%arg0: i32) -> (i32, i32) {
    %c0_i32 = arith.constant 0 : i32
    %c0_i32_0 = arith.constant 0 : i32
    %c0_i32_1 = arith.constant 0 : i32
    return %c0_i32, %c0_i32_0 : i32, i32
  }
  func.func @transform_4(%arg0: i32) -> (i32, i32) {
    %c0_i32 = arith.constant 0 : i32
    %c0_i32_0 = arith.constant 0 : i32
    %c0_i32_1 = arith.constant 0 : i32
    return %c0_i32, %c0_i32_0 : i32, i32
  }
  func.func @transform_5(%arg0: i32) -> (i32, i32) {
    %c0_i32 = arith.constant 0 : i32
    %c0_i32_0 = arith.constant 0 : i32
    %c0_i32_1 = arith.constant 0 : i32
    return %c0_i32, %c0_i32_0 : i32, i32
  }
  func.func @transform_6(%arg0: i32) -> (i32, i32) {
    %c0_i32 = arith.constant 0 : i32
    %c0_i32_0 = arith.constant 0 : i32
    %c0_i32_1 = arith.constant 0 : i32
    return %c0_i32, %c0_i32_0 : i32, i32
  }
  func.func @transform_7(%arg0: i32) -> (i32, i32) {
    %c0_i32 = arith.constant 0 : i32
    %c0_i32_0 = arith.constant 0 : i32
    %c0_i32_1 = arith.constant 0 : i32
    return %c0_i32, %c0_i32_0 : i32, i32
  }
  func.func @transform_8(%arg0: i32) -> (i32, i32) {
    %c0_i32 = arith.constant 0 : i32
    %c0_i32_0 = arith.constant 0 : i32
    %c0_i32_1 = arith.constant 0 : i32
    return %c0_i32, %c0_i32_0 : i32, i32
  }
  func.func @transform_9(%arg0: i32) -> (i32, i32) {
    %c0_i32 = arith.constant 0 : i32
    %c0_i32_0 = arith.constant 0 : i32
    %c0_i32_1 = arith.constant 0 : i32
    return %c0_i32, %c0_i32_0 : i32, i32
  }
  func.func @transform_10(%arg0: i32) -> (i32, i32) {
    %c0_i32 = arith.constant 0 : i32
    %c0_i32_0 = arith.constant 0 : i32
    %c0_i32_1 = arith.constant 0 : i32
    return %c0_i32, %c0_i32_0 : i32, i32
  }
  func.func @transform_11(%arg0: i32) -> (i32, i32) {
    %c0_i32 = arith.constant 0 : i32
    %c0_i32_0 = arith.constant 0 : i32
    return %arg0, %c0_i32 : i32, i32
  }
}

</mosaic_0001>

<llo_original>
// kernel: block_forward.1
$region0: #{block_forward.1}
  #allocation0 [shape = 'u32[]', space=smem, size = 0x4, offset = 0x4, fixed_abs, tag = 'smem constant byte address 0x4 - core index']
  #allocation1 [shape = 'u32[144,128]{1,0:T(1,128)}', space=vmem, size = 0x12000, scoped, tag = 'internal scratch']
  %s0 = inlined_call_operand.vmem [shape: f32[128,32], index: 0, kind: input, shape index: {}]
  %s1 = inlined_call_operand.hbm [shape: bf16[32,32], index: 1, kind: input, shape index: {}]
  %s2 = inlined_call_operand.hbm [shape: bf16[32,32], index: 2, kind: input, shape index: {}]
  %s3 = inlined_call_operand.hbm [shape: bf16[32,32], index: 3, kind: input, shape index: {}]
  %s4 = inlined_call_operand.hbm [shape: bf16[32,32], index: 4, kind: input, shape index: {}]
  %s5 = inlined_call_operand.hbm [shape: bf16[32,128], index: 5, kind: input, shape index: {}]
  %s6 = inlined_call_operand.vmem [shape: bf16[128,32], index: 6, kind: input, shape index: {}]
  %s7 = inlined_call_operand.vmem [shape: f32[6,32], index: 7, kind: input, shape index: {}]
  %s8 = inlined_call_operand.vmem [shape: f32[1,128], index: 8, kind: input, shape index: {}]
  %s9 = inlined_call_operand.vmem [shape: bf16[256,32], index: 9, kind: input, shape index: {}]
  %s10 = inlined_call_operand.vmem [shape: f32[64,256], index: 10, kind: input, shape index: {}]
  %s11 = inlined_call_operand.hbm [shape: f32[128,32], index: 11, kind: output, shape index: {}]
  %s12 = sld [smem:[#allocation0]]
  $region97: #{block_forward.1} parent=0
    _
  %s14 = ssub.s32 1, %s12
  %s15 = scalar_select 0, %s14, %s12
  $region1: #{block_forward.1} parent=0
    #allocation2 [shape = 'u8[8192]{0}', space=vmem, size = 0x2000, scoped, tag = 'input window, operand 1, single buffered']
    #allocation3 [shape = 's32[2]{0}', space=sflag, size = 0x8, scoped, tag = 'scoped memory for block_forward.1']
    #allocation4 [shape = 's32[2]{0}', space=sflag, size = 0x8, scoped, tag = 'scoped memory for block_forward.1']
    #allocation5 [shape = 'u8[8192]{0}', space=vmem, size = 0x2000, scoped, tag = 'input window, operand 2, single buffered']
    #allocation6 [shape = 's32[1]{0}', space=sflag, size = 0x4, scoped, tag = 'scoped memory for block_forward.1']
    #allocation7 [shape = 'u8[8192]{0}', space=vmem, size = 0x2000, scoped, tag = 'input window, operand 3, single buffered']
    #allocation8 [shape = 'u8[8192]{0}', space=vmem, size = 0x2000, scoped, tag = 'input window, operand 4, single buffered']
    #allocation9 [shape = 's32[1]{0}', space=sflag, size = 0x4, scoped, tag = 'scoped memory for block_forward.1']
    #allocation10 [shape = 'u8[8192]{0}', space=vmem, size = 0x2000, scoped, tag = 'input window, operand 5, single buffered']
    #allocation11 [shape = 'u8[65536]{0}', space=vmem, size = 0x10000, scoped, tag = 'output window, operand 0']
    %16 = vsyncpa [#allocation3], 0
    %17 = vsyncpa [#allocation6], 0
    %18 = vsyncpa [#allocation9], 0
    %19 = vsyncpa [#allocation4], 0
    %s20 = scalar_lea.sflag [#allocation4], 1
    %21 = vsyncpa %s20, 0
    loop: start=0, step=1, limit=4
    $region2: #{block_forward.1} parent=1 // loop_pre_header
      _
    $region3: #{block_forward.1} parent=1 // loop_header
      %s23 = sphi 0, %s27
      %p24 = scmp.ge.s32.totalorder %s23, 4
      %s33 = sphi 0, %s35
      %s36 = sphi 0, %s33
      %s37 = sphi 0, %s36
      %s53 = sphi 0, %s37
      %s57 = sphi 0, %s57
      %s59 = sphi 0, %s57
      %s60 = sphi 0, %s59
      %s74 = sphi 0, %s60
      %s78 = sphi 0, %s78
      %s80 = sphi 0, %s78
      %s81 = sphi 0, %s80
      %s95 = sphi 0, %s81
      %s99 = sphi 0, %s99
      %s101 = sphi 0, %s99
      %s102 = sphi 0, %s101
      %s116 = sphi 0, %s102
      %s120 = sphi 0, %s120
      %s122 = sphi 0, %s120
      %s123 = sphi 0, %s122
      %s137 = sphi 0, %s123
      %s141 = sphi 0, %s141
      %s143 = sphi 0, %s141
      %s144 = sphi 0, %s143
      %s158 = sphi 0, %s144
      %s162 = sphi 0, %s162
      %s164 = sphi 0, %s162
      %s165 = sphi 0, %s164
      %s179 = sphi 0, %s165
      %s183 = sphi 0, %s183
      %s185 = sphi 0, %s183
      %s186 = sphi 0, %s185
      %s200 = sphi 0, %s186
      %s204 = sphi 0, %s204
      %s206 = sphi 0, %s204
      %s207 = sphi 0, %s206
      %s221 = sphi 0, %s207
      %s225 = sphi 0, %s225
      %s227 = sphi 0, %s225
      %s228 = sphi 0, %s227
      %s242 = sphi 0, %s228
      %s246 = sphi 0, %s246
      %s248 = sphi 0, %s246
      %s249 = sphi 0, %s248
      %s263 = sphi 0, %s249
      %s269 = sphi 0, %s271
      %s272 = sphi 0, %s269
      %s273 = sphi 0, %s272
      %s289 = sphi 0, %s273
    $region4: #{block_forward.1} parent=1 // loop_header_branch
      %26 = sbr.rel (%p24) target = $region8
    $region5: #{block_forward.1} parent=1 // loop_body
      %s28 = ssub.s32 %s23, 1
      %s29 = ssub.s32 %s23, 2
      %s30 = sadd.s32 %s23, 1
      %s31 = ssub.s32 %s23, %s30
      %p32 = scmp.eq.s32.totalorder %s31, 0
      %s34 = sadd.s32 %s33, 1
      %s35 = scalar_select %p32, %s33, %s34
      %p38 = pneg %p32
      %p39 = scmp.eq.s32.totalorder %s23, 1
      %p40 = por %p38, %p39
      %p41 = scmp.ne.s32.totalorder %s33, %s36
      %p42 = scmp.eq.s32.totalorder %s23, 0
      %p43 = por %p41, %p42
      %p44 = scmp.ne.s32.totalorder %s33, %s36
      %p45 = scmp.eq.s32.totalorder %s28, 1
      %p46 = por %p44, %p45
      %p47 = scmp.ne.s32.totalorder %s36, %s37
      %p48 = scmp.eq.s32.totalorder %s28, 0
      %p49 = por %p47, %p48
      %p50 = scmp.ne.s32.totalorder %s36, %s37
      %p51 = scmp.eq.s32.totalorder %s29, 1
      %p52 = por %p50, %p51
      %p54 = scmp.ne.s32.totalorder %s37, %s53
      %p55 = scmp.eq.s32.totalorder %s29, 0
      %p56 = por %p54, %p55
      %s58 = sadd.s32 %s57, 1
      %p61 = scmp.eq.s32.totalorder %s23, 1
      %p62 = scmp.ne.s32.totalorder %s57, %s59
      %p63 = scmp.eq.s32.totalorder %s23, 0
      %p64 = por %p62, %p63
      %p65 = scmp.ne.s32.totalorder %s57, %s59
      %p66 = scmp.eq.s32.totalorder %s28, 1
      %p67 = por %p65, %p66
      %p68 = scmp.ne.s32.totalorder %s59, %s60
      %p69 = scmp.eq.s32.totalorder %s28, 0
      %p70 = por %p68, %p69
      %p71 = scmp.ne.s32.totalorder %s59, %s60
      %p72 = scmp.eq.s32.totalorder %s29, 1
      %p73 = por %p71, %p72
      %p75 = scmp.ne.s32.totalorder %s60, %s74
      %p76 = scmp.eq.s32.totalorder %s29, 0
      %p77 = por %p75, %p76
      %s79 = sadd.s32 %s78, 1
      %p82 = scmp.eq.s32.totalorder %s23, 1
      %p83 = scmp.ne.s32.totalorder %s78, %s80
      %p84 = scmp.eq.s32.totalorder %s23, 0
      %p85 = por %p83, %p84
      %p86 = scmp.ne.s32.totalorder %s78, %s80
      %p87 = scmp.eq.s32.totalorder %s28, 1
      %p88 = por %p86, %p87
      %p89 = scmp.ne.s32.totalorder %s80, %s81
      %p90 = scmp.eq.s32.totalorder %s28, 0
      %p91 = por %p89, %p90
      %p92 = scmp.ne.s32.totalorder %s80, %s81
      %p93 = scmp.eq.s32.totalorder %s29, 1
      %p94 = por %p92, %p93
      %p96 = scmp.ne.s32.totalorder %s81, %s95
      %p97 = scmp.eq.s32.totalorder %s29, 0
      %p98 = por %p96, %p97
      %s100 = sadd.s32 %s99, 1
      %p103 = scmp.eq.s32.totalorder %s23, 1
      %p104 = scmp.ne.s32.totalorder %s99, %s101
      %p105 = scmp.eq.s32.totalorder %s23, 0
      %p106 = por %p104, %p105
      %p107 = scmp.ne.s32.totalorder %s99, %s101
      %p108 = scmp.eq.s32.totalorder %s28, 1
      %p109 = por %p107, %p108
      %p110 = scmp.ne.s32.totalorder %s101, %s102
      %p111 = scmp.eq.s32.totalorder %s28, 0
      %p112 = por %p110, %p111
      %p113 = scmp.ne.s32.totalorder %s101, %s102
      %p114 = scmp.eq.s32.totalorder %s29, 1
      %p115 = por %p113, %p114
      %p117 = scmp.ne.s32.totalorder %s102, %s116
      %p118 = scmp.eq.s32.totalorder %s29, 0
      %p119 = por %p117, %p118
      %s121 = sadd.s32 %s120, 1
      %p124 = scmp.eq.s32.totalorder %s23, 1
      %p125 = scmp.ne.s32.totalorder %s120, %s122
      %p126 = scmp.eq.s32.totalorder %s23, 0
      %p127 = por %p125, %p126
      %p128 = scmp.ne.s32.totalorder %s120, %s122
      %p129 = scmp.eq.s32.totalorder %s28, 1
      %p130 = por %p128, %p129
      %p131 = scmp.ne.s32.totalorder %s122, %s123
      %p132 = scmp.eq.s32.totalorder %s28, 0
      %p133 = por %p131, %p132
      %p134 = scmp.ne.s32.totalorder %s122, %s123
      %p135 = scmp.eq.s32.totalorder %s29, 1
      %p136 = por %p134, %p135
      %p138 = scmp.ne.s32.totalorder %s123, %s137
      %p139 = scmp.eq.s32.totalorder %s29, 0
      %p140 = por %p138, %p139
      %s142 = sadd.s32 %s141, 1
      %p145 = scmp.eq.s32.totalorder %s23, 1
      %p146 = scmp.ne.s32.totalorder %s141, %s143
      %p147 = scmp.eq.s32.totalorder %s23, 0
      %p148 = por %p146, %p147
      %p149 = scmp.ne.s32.totalorder %s141, %s143
      %p150 = scmp.eq.s32.totalorder %s28, 1
      %p151 = por %p149, %p150
      %p152 = scmp.ne.s32.totalorder %s143, %s144
      %p153 = scmp.eq.s32.totalorder %s28, 0
      %p154 = por %p152, %p153
      %p155 = scmp.ne.s32.totalorder %s143, %s144
      %p156 = scmp.eq.s32.totalorder %s29, 1
      %p157 = por %p155, %p156
      %p159 = scmp.ne.s32.totalorder %s144, %s158
      %p160 = scmp.eq.s32.totalorder %s29, 0
      %p161 = por %p159, %p160
      %s163 = sadd.s32 %s162, 1
      %p166 = scmp.eq.s32.totalorder %s23, 1
      %p167 = scmp.ne.s32.totalorder %s162, %s164
      %p168 = scmp.eq.s32.totalorder %s23, 0
      %p169 = por %p167, %p168
      %p170 = scmp.ne.s32.totalorder %s162, %s164
      %p171 = scmp.eq.s32.totalorder %s28, 1
      %p172 = por %p170, %p171
      %p173 = scmp.ne.s32.totalorder %s164, %s165
      %p174 = scmp.eq.s32.totalorder %s28, 0
      %p175 = por %p173, %p174
      %p176 = scmp.ne.s32.totalorder %s164, %s165
      %p177 = scmp.eq.s32.totalorder %s29, 1
      %p178 = por %p176, %p177
      %p180 = scmp.ne.s32.totalorder %s165, %s179
      %p181 = scmp.eq.s32.totalorder %s29, 0
      %p182 = por %p180, %p181
      %s184 = sadd.s32 %s183, 1
      %p187 = scmp.eq.s32.totalorder %s23, 1
      %p188 = scmp.ne.s32.totalorder %s183, %s185
      %p189 = scmp.eq.s32.totalorder %s23, 0
      %p190 = por %p188, %p189
      %p191 = scmp.ne.s32.totalorder %s183, %s185
      %p192 = scmp.eq.s32.totalorder %s28, 1
      %p193 = por %p191, %p192
      %p194 = scmp.ne.s32.totalorder %s185, %s186
      %p195 = scmp.eq.s32.totalorder %s28, 0
      %p196 = por %p194, %p195
      %p197 = scmp.ne.s32.totalorder %s185, %s186
      %p198 = scmp.eq.s32.totalorder %s29, 1
      %p199 = por %p197, %p198
      %p201 = scmp.ne.s32.totalorder %s186, %s200
      %p202 = scmp.eq.s32.totalorder %s29, 0
      %p203 = por %p201, %p202
      %s205 = sadd.s32 %s204, 1
      %p208 = scmp.eq.s32.totalorder %s23, 1
      %p209 = scmp.ne.s32.totalorder %s204, %s206
      %p210 = scmp.eq.s32.totalorder %s23, 0
      %p211 = por %p209, %p210
      %p212 = scmp.ne.s32.totalorder %s204, %s206
      %p213 = scmp.eq.s32.totalorder %s28, 1
      %p214 = por %p212, %p213
      %p215 = scmp.ne.s32.totalorder %s206, %s207
      %p216 = scmp.eq.s32.totalorder %s28, 0
      %p217 = por %p215, %p216
      %p218 = scmp.ne.s32.totalorder %s206, %s207
      %p219 = scmp.eq.s32.totalorder %s29, 1
      %p220 = por %p218, %p219
      %p222 = scmp.ne.s32.totalorder %s207, %s221
      %p223 = scmp.eq.s32.totalorder %s29, 0
      %p224 = por %p222, %p223
      %s226 = sadd.s32 %s225, 1
      %p229 = scmp.eq.s32.totalorder %s23, 1
      %p230 = scmp.ne.s32.totalorder %s225, %s227
      %p231 = scmp.eq.s32.totalorder %s23, 0
      %p232 = por %p230, %p231
      %p233 = scmp.ne.s32.totalorder %s225, %s227
      %p234 = scmp.eq.s32.totalorder %s28, 1
      %p235 = por %p233, %p234
      %p236 = scmp.ne.s32.totalorder %s227, %s228
      %p237 = scmp.eq.s32.totalorder %s28, 0
      %p238 = por %p236, %p237
      %p239 = scmp.ne.s32.totalorder %s227, %s228
      %p240 = scmp.eq.s32.totalorder %s29, 1
      %p241 = por %p239, %p240
      %p243 = scmp.ne.s32.totalorder %s228, %s242
      %p244 = scmp.eq.s32.totalorder %s29, 0
      %p245 = por %p243, %p244
      %s247 = sadd.s32 %s246, 1
      %p250 = scmp.eq.s32.totalorder %s23, 1
      %p251 = scmp.ne.s32.totalorder %s246, %s248
      %p252 = scmp.eq.s32.totalorder %s23, 0
      %p253 = por %p251, %p252
      %p254 = scmp.ne.s32.totalorder %s246, %s248
      %p255 = scmp.eq.s32.totalorder %s28, 1
      %p256 = por %p254, %p255
      %p257 = scmp.ne.s32.totalorder %s248, %s249
      %p258 = scmp.eq.s32.totalorder %s28, 0
      %p259 = por %p257, %p258
      %p260 = scmp.ne.s32.totalorder %s248, %s249
      %p261 = scmp.eq.s32.totalorder %s29, 1
      %p262 = por %p260, %p261
      %p264 = scmp.ne.s32.totalorder %s249, %s263
      %p265 = scmp.eq.s32.totalorder %s29, 0
      %p266 = por %p264, %p265
      %s267 = ssub.s32 %s23, %s30
      %p268 = scmp.eq.s32.totalorder %s267, 0
      %s270 = sadd.s32 %s269, 1
      %s271 = scalar_select %p268, %s269, %s270
      %p274 = pneg %p268
      %p275 = scmp.eq.s32.totalorder %s23, 1
      %p276 = por %p274, %p275
      %p277 = scmp.ne.s32.totalorder %s269, %s272
      %p278 = scmp.eq.s32.totalorder %s23, 0
      %p279 = por %p277, %p278
      %p280 = scmp.ne.s32.totalorder %s269, %s272
      %p281 = scmp.eq.s32.totalorder %s28, 1
      %p282 = por %p280, %p281
      %p283 = scmp.ne.s32.totalorder %s272, %s273
      %p284 = scmp.eq.s32.totalorder %s28, 0
      %p285 = por %p283, %p284
      %p286 = scmp.ne.s32.totalorder %s272, %s273
      %p287 = scmp.eq.s32.totalorder %s29, 1
      %p288 = por %p286, %p287
      %p290 = scmp.ne.s32.totalorder %s273, %s289
      %p291 = scmp.eq.s32.totalorder %s29, 0
      %p292 = por %p290, %p291
      %p293 = scmp.le.s32.totalorder 1, %s23
      %p294 = scmp.lt.s32.totalorder %s23, 3
      %p295 = pnand %p293, %p294
      %p296 = pneg %p295
      // Predicated region
      $region9: #{block_forward.1} parent=5 // pred_check
        _
      $region10: #{block_forward.1} parent=5 // pred_check_branch
        %298 = sbr.rel (%p295) target = $region12
      $region11: #{block_forward.1} parent=5 // pred_region
        %s299 = ssub.s32 %s23, 1
        // Predicated region
        $region13: #{block_forward.1} parent=11 // pred_check
          %p300 = pneg %p70
        $region14: #{block_forward.1} parent=11 // pred_check_branch
          %302 = sbr.rel (%p300) target = $region16
        $region15: #{block_forward.1} parent=11 // pred_region
          %s304 = ssub.s32 256, 256
          %305 = vsyncadd [#allocation3], %s304
          %s306 = sshll.u32 [#allocation2], 4
          %s307 = int_to_ptr.vmem [resolvable:$true] %s306
          %312 = dma.hbm_to_vmem [thread:$0]  %s1, 256, %s307, [#allocation3], 64, 64, 4
        $region16: #{block_forward.1} parent=11 // pred_fallthru
          _
        // Predicated region
        $region17: #{block_forward.1} parent=11 // pred_check
          %p313 = pneg %p91
        $region18: #{block_forward.1} parent=11 // pred_check_branch
          %315 = sbr.rel (%p313) target = $region20
        $region19: #{block_forward.1} parent=11 // pred_region
          %s317 = ssub.s32 256, 256
          %318 = vsyncadd [#allocation6], %s317
          %s319 = sshll.u32 [#allocation5], 4
          %s320 = int_to_ptr.vmem [resolvable:$true] %s319
          %325 = dma.hbm_to_vmem [thread:$0]  %s2, 256, %s320, [#allocation6], 64, 64, 4
        $region20: #{block_forward.1} parent=11 // pred_fallthru
          _
        // Predicated region
        $region21: #{block_forward.1} parent=11 // pred_check
          %p326 = pneg %p112
        $region22: #{block_forward.1} parent=11 // pred_check_branch
          %328 = sbr.rel (%p326) target = $region24
        $region23: #{block_forward.1} parent=11 // pred_region
          %s330 = ssub.s32 256, 256
          %331 = vsyncadd [#allocation6], %s330
          %s332 = sshll.u32 [#allocation7], 4
          %s333 = int_to_ptr.vmem [resolvable:$true] %s332
          %338 = dma.hbm_to_vmem [thread:$0]  %s3, 256, %s333, [#allocation6], 64, 64, 4
        $region24: #{block_forward.1} parent=11 // pred_fallthru
          _
        // Predicated region
        $region25: #{block_forward.1} parent=11 // pred_check
          %p339 = pneg %p133
        $region26: #{block_forward.1} parent=11 // pred_check_branch
          %341 = sbr.rel (%p339) target = $region28
        $region27: #{block_forward.1} parent=11 // pred_region
          %s343 = ssub.s32 256, 256
          %344 = vsyncadd [#allocation9], %s343
          %s345 = sshll.u32 [#allocation8], 4
          %s346 = int_to_ptr.vmem [resolvable:$true] %s345
          %351 = dma.hbm_to_vmem [thread:$0]  %s4, 256, %s346, [#allocation9], 64, 64, 4
        $region28: #{block_forward.1} parent=11 // pred_fallthru
          _
        // Predicated region
        $region29: #{block_forward.1} parent=11 // pred_check
          %p352 = pneg %p154
        $region30: #{block_forward.1} parent=11 // pred_check_branch
          %354 = sbr.rel (%p352) target = $region32
        $region31: #{block_forward.1} parent=11 // pred_region
          %s356 = ssub.s32 256, 256
          %357 = vsyncadd [#allocation9], %s356
          %s358 = sshll.u32 [#allocation10], 4
          %s359 = int_to_ptr.vmem [resolvable:$true] %s358
          %364 = dma.hbm_to_vmem [thread:$0]  %s5, 256, %s359, [#allocation9], 64, 64, 4
        $region32: #{block_forward.1} parent=11 // pred_fallthru
          _
        // Predicated region
        $region33: #{block_forward.1} parent=11 // pred_check
          %p365 = pneg %p175
        $region34: #{block_forward.1} parent=11 // pred_check_branch
          %367 = sbr.rel (%p365) target = $region36
        $region35: #{block_forward.1} parent=11 // pred_region
          _
        $region36: #{block_forward.1} parent=11 // pred_fallthru
          _
        // Predicated region
        $region37: #{block_forward.1} parent=11 // pred_check
          %p368 = pneg %p196
        $region38: #{block_forward.1} parent=11 // pred_check_branch
          %370 = sbr.rel (%p368) target = $region40
        $region39: #{block_forward.1} parent=11 // pred_region
          _
        $region40: #{block_forward.1} parent=11 // pred_fallthru
          _
        // Predicated region
        $region41: #{block_forward.1} parent=11 // pred_check
          %p371 = pneg %p217
        $region42: #{block_forward.1} parent=11 // pred_check_branch
          %373 = sbr.rel (%p371) target = $region44
        $region43: #{block_forward.1} parent=11 // pred_region
          _
        $region44: #{block_forward.1} parent=11 // pred_fallthru
          _
        // Predicated region
        $region45: #{block_forward.1} parent=11 // pred_check
          %p374 = pneg %p238
        $region46: #{block_forward.1} parent=11 // pred_check_branch
          %376 = sbr.rel (%p374) target = $region48
        $region47: #{block_forward.1} parent=11 // pred_region
          _
        $region48: #{block_forward.1} parent=11 // pred_fallthru
          _
        // Predicated region
        $region49: #{block_forward.1} parent=11 // pred_check
          %p377 = pneg %p259
        $region50: #{block_forward.1} parent=11 // pred_check_branch
          %379 = sbr.rel (%p377) target = $region52
        $region51: #{block_forward.1} parent=11 // pred_region
          _
        $region52: #{block_forward.1} parent=11 // pred_fallthru
          _
      $region12: #{block_forward.1} parent=5 // pred_fallthru
        _
      %p380 = scmp.lt.s32.totalorder %s23, 2
      // Predicated region
      $region53: #{block_forward.1} parent=5 // pred_check
        %p381 = pneg %p380
      $region54: #{block_forward.1} parent=5 // pred_check_branch
        %383 = sbr.rel (%p381) target = $region56
      $region55: #{block_forward.1} parent=5 // pred_region
        // Predicated region
        $region57: #{block_forward.1} parent=55 // pred_check
          %p384 = pneg %p43
        $region58: #{block_forward.1} parent=55 // pred_check_branch
          %386 = sbr.rel (%p384) target = $region60
        $region59: #{block_forward.1} parent=55 // pred_region
          %s387 = smul.u32 8, %s23
          %p388 = scmp.lt.s32.totalorder %s387, 15
          %s389 = scalar_select %p388, %s387, 15
          %s390 = smul.addr %s389, 8
          %s391 = scalar_lea.vmem %s0, %s390
          %s392 = smul.u32 8, %s23
        $region60: #{block_forward.1} parent=55 // pred_fallthru
          _
      $region56: #{block_forward.1} parent=5 // pred_fallthru
        _
      %p393 = scmp.le.s32.totalorder 1, %s23
      %p394 = scmp.lt.s32.totalorder %s23, 3
      %p395 = pnand %p393, %p394
      %p396 = pneg %p395
      // Predicated region
      $region61: #{block_forward.1} parent=5 // pred_check
        _
      $region62: #{block_forward.1} parent=5 // pred_check_branch
        %398 = sbr.rel (%p395) target = $region64
      $region63: #{block_forward.1} parent=5 // pred_region
        %s399 = ssub.s32 %s23, 1
        // Predicated region
        $region65: #{block_forward.1} parent=63 // pred_check
          %p400 = pneg %p70
        $region66: #{block_forward.1} parent=63 // pred_check_branch
          %402 = sbr.rel (%p400) target = $region68
        $region67: #{block_forward.1} parent=63 // pred_region
          %403 = dma.done [#allocation3], 256
        $region68: #{block_forward.1} parent=63 // pred_fallthru
          _
        // Predicated region
        $region69: #{block_forward.1} parent=63 // pred_check
          %p404 = pneg %p91
        $region70: #{block_forward.1} parent=63 // pred_check_branch
          %406 = sbr.rel (%p404) target = $region72
        $region71: #{block_forward.1} parent=63 // pred_region
          %407 = dma.done [#allocation6], 256
        $region72: #{block_forward.1} parent=63 // pred_fallthru
          _
        // Predicated region
        $region73: #{block_forward.1} parent=63 // pred_check
          %p408 = pneg %p112
        $region74: #{block_forward.1} parent=63 // pred_check_branch
          %410 = sbr.rel (%p408) target = $region76
        $region75: #{block_forward.1} parent=63 // pred_region
          %411 = dma.done [#allocation6], 256
        $region76: #{block_forward.1} parent=63 // pred_fallthru
          _
        // Predicated region
        $region77: #{block_forward.1} parent=63 // pred_check
          %p412 = pneg %p133
        $region78: #{block_forward.1} parent=63 // pred_check_branch
          %414 = sbr.rel (%p412) target = $region80
        $region79: #{block_forward.1} parent=63 // pred_region
          %415 = dma.done [#allocation9], 256
        $region80: #{block_forward.1} parent=63 // pred_fallthru
          _
        // Predicated region
        $region81: #{block_forward.1} parent=63 // pred_check
          %p416 = pneg %p154
        $region82: #{block_forward.1} parent=63 // pred_check_branch
          %418 = sbr.rel (%p416) target = $region84
        $region83: #{block_forward.1} parent=63 // pred_region
          %419 = dma.done [#allocation9], 256
        $region84: #{block_forward.1} parent=63 // pred_fallthru
          _
        %s420 = smul.u32 8, %s28
        %p421 = scmp.lt.s32.totalorder %s420, 15
        %s422 = scalar_select %p421, %s420, 15
        %s423 = smul.addr %s422, 8
        %s424 = scalar_lea.vmem %s0, %s423
        %p425 = pneg %p49
        %p426 = pneg %p46
        %p427 = pneg %p70
        %p428 = pneg %p67
        %p429 = pneg %p91
        %p430 = pneg %p88
        %p431 = pneg %p112
        %p432 = pneg %p109
        %p433 = pneg %p133
        %p434 = pneg %p130
        %p435 = pneg %p154
        %p436 = pneg %p151
        %p437 = pneg %p175
        %p438 = pneg %p172
        %p439 = pneg %p196
        %p440 = pneg %p193
        %p441 = pneg %p217
        %p442 = pneg %p214
        %p443 = pneg %p238
        %p444 = pneg %p235
        %p445 = pneg %p259
        %p446 = pneg %p256
        %p447 = pneg %p285
        %p448 = pneg %p282
        %s449 = sand.u32 %s272, 1
        %s450 = scalar_lea.sflag [#allocation4], %s449
        %s451 = sand.u32 %s272, 1
        %s452 = smul.addr %s451, 64
        %s453 = scalar_lea.vmem [#allocation11], %s452
        %s454 = smul.u32 8, %s28
        %p455 = scmp.lt.s32.totalorder %s454, 15
        %s456 = scalar_select %p455, %s454, 15
        %s457 = smul.addr %s456, 8
        %s458 = scalar_lea.vmem %s0, %s457
        %s459 = smul.u32 8, %s28
        %s460 = smul.u32 8, %s28
        %v462 = vld [vmem:[%s458] sm:$0xff]
        %v463 = vld [vmem:[%s458 + $0x8] sm:$0xff]
        %v464 = vld [vmem:[%s458 + $0x10] sm:$0xff]
        %v465 = vld [vmem:[%s458 + $0x18] sm:$0xff]
        %v466 = vld [vmem:[%s458 + $0x20] sm:$0xff]
        %v467 = vld [vmem:[%s458 + $0x28] sm:$0xff]
        %v468 = vld [vmem:[%s458 + $0x30] sm:$0xff]
        %v469 = vld [vmem:[%s458 + $0x38] sm:$0xff]
        %v470 = vld [vmem:[%s7] sm:$0x3f]
        %vm471 = vcmask 261120
        %v472 = vsel %vm471, %v462, 0.0
        %473 = vadd.xlane.f32.xlu0 %v472
        %v474 = vpop.xlane.xlu0 %473
        %v475 = vsel %vm471, %v463, 0.0
        %476 = vadd.xlane.f32.xlu0 %v475
        %v477 = vpop.xlane.xlu0 %476
        %v478 = vsel %vm471, %v464, 0.0
        %479 = vadd.xlane.f32.xlu0 %v478
        %v480 = vpop.xlane.xlu0 %479
        %v481 = vsel %vm471, %v465, 0.0
        %482 = vadd.xlane.f32.xlu0 %v481
        %v483 = vpop.xlane.xlu0 %482
        %v484 = vsel %vm471, %v466, 0.0
        %485 = vadd.xlane.f32.xlu0 %v484
        %v486 = vpop.xlane.xlu0 %485
        %v487 = vsel %vm471, %v467, 0.0
        %488 = vadd.xlane.f32.xlu0 %v487
        %v489 = vpop.xlane.xlu0 %488
        %v490 = vsel %vm471, %v468, 0.0
        %491 = vadd.xlane.f32.xlu0 %v490
        %v492 = vpop.xlane.xlu0 %491
        %v493 = vsel %vm471, %v469, 0.0
        %494 = vadd.xlane.f32.xlu0 %v493
        %v495 = vpop.xlane.xlu0 %494
        %v496 = vrcp.pop 32.0
        %v497 = vmul.f32 %v474, %v496
        %v498 = vmul.f32 %v477, %v496
        %v499 = vmul.f32 %v480, %v496
        %v500 = vmul.f32 %v483, %v496
        %v501 = vmul.f32 %v486, %v496
        %v502 = vmul.f32 %v489, %v496
        %v503 = vmul.f32 %v492, %v496
        %v504 = vmul.f32 %v495, %v496
        %v505 = vsub.f32 %v462, %v497
        %v506 = vsub.f32 %v463, %v498
        %v507 = vsub.f32 %v464, %v499
        %v508 = vsub.f32 %v465, %v500
        %v509 = vsub.f32 %v466, %v501
        %v510 = vsub.f32 %v467, %v502
        %v511 = vsub.f32 %v468, %v503
        %v512 = vsub.f32 %v469, %v504
        %v513 = vmul.f32 %v505, %v505
        %v514 = vmul.f32 %v506, %v506
        %v515 = vmul.f32 %v507, %v507
        %v516 = vmul.f32 %v508, %v508
        %v517 = vmul.f32 %v509, %v509
        %v518 = vmul.f32 %v510, %v510
        %v519 = vmul.f32 %v511, %v511
        %v520 = vmul.f32 %v512, %v512
        %v521 = vsel %vm471, %v513, 0.0
        %522 = vadd.xlane.f32.xlu0 %v521
        %v523 = vpop.xlane.xlu0 %522
        %v524 = vsel %vm471, %v514, 0.0
        %525 = vadd.xlane.f32.xlu0 %v524
        %v526 = vpop.xlane.xlu0 %525
        %v527 = vsel %vm471, %v515, 0.0
        %528 = vadd.xlane.f32.xlu0 %v527
        %v529 = vpop.xlane.xlu0 %528
        %v530 = vsel %vm471, %v516, 0.0
        %531 = vadd.xlane.f32.xlu0 %v530
        %v532 = vpop.xlane.xlu0 %531
        %v533 = vsel %vm471, %v517, 0.0
        %534 = vadd.xlane.f32.xlu0 %v533
        %v535 = vpop.xlane.xlu0 %534
        %v536 = vsel %vm471, %v518, 0.0
        %537 = vadd.xlane.f32.xlu0 %v536
        %v538 = vpop.xlane.xlu0 %537
        %v539 = vsel %vm471, %v519, 0.0
        %540 = vadd.xlane.f32.xlu0 %v539
        %v541 = vpop.xlane.xlu0 %540
        %v542 = vsel %vm471, %v520, 0.0
        %543 = vadd.xlane.f32.xlu0 %v542
        %v544 = vpop.xlane.xlu0 %543
        %v545 = vmul.f32 %v523, %v496
        %v546 = vmul.f32 %v526, %v496
        %v547 = vmul.f32 %v529, %v496
        %v548 = vmul.f32 %v532, %v496
        %v549 = vmul.f32 %v535, %v496
        %v550 = vmul.f32 %v538, %v496
        %v551 = vmul.f32 %v541, %v496
        %v552 = vmul.f32 %v544, %v496
        %v553 = vadd.f32 %v545, 1e-05
        %v554 = vadd.f32 %v546, 1e-05
        %v555 = vadd.f32 %v547, 1e-05
        %v556 = vadd.f32 %v548, 1e-05
        %v557 = vadd.f32 %v549, 1e-05
        %v558 = vadd.f32 %v550, 1e-05
        %v559 = vadd.f32 %v551, 1e-05
        %v560 = vadd.f32 %v552, 1e-05
        %v561 = vrsqrt.pop %v553
        %v562 = vrsqrt.pop %v554
        %v563 = vrsqrt.pop %v555
        %v564 = vrsqrt.pop %v556
        %v565 = vrsqrt.pop %v557
        %v566 = vrsqrt.pop %v558
        %v567 = vrsqrt.pop %v559
        %v568 = vrsqrt.pop %v560
        %v569 = vmul.f32 %v505, %v561
        %v570 = vmul.f32 %v506, %v562
        %v571 = vmul.f32 %v507, %v563
        %v572 = vmul.f32 %v508, %v564
        %v573 = vmul.f32 %v509, %v565
        %v574 = vmul.f32 %v510, %v566
        %v575 = vmul.f32 %v511, %v567
        %v576 = vmul.f32 %v512, %v568
        %v577 = vlaneseq
        %v578 = vshrl.u32 %v577, 7
        %v579 = vsub.s32 0, %v578
        %v580 = vrot.slane %v470, %v579
        %v581 = vmul.f32 %v569, %v580
        %v582 = vmul.f32 %v570, %v580
        %v583 = vmul.f32 %v571, %v580
        %v584 = vmul.f32 %v572, %v580
        %v585 = vmul.f32 %v573, %v580
        %v586 = vmul.f32 %v574, %v580
        %v587 = vmul.f32 %v575, %v580
        %v588 = vmul.f32 %v576, %v580
        %v589 = vlaneseq
        %v590 = vshrl.u32 %v589, 7
        %v591 = vsub.s32 1, %v590
        %v592 = vrot.slane %v470, %v591
        %v593 = vadd.f32 %v581, %v592
        %v594 = vadd.f32 %v582, %v592
        %v595 = vadd.f32 %v583, %v592
        %v596 = vadd.f32 %v584, %v592
        %v597 = vadd.f32 %v585, %v592
        %v598 = vadd.f32 %v586, %v592
        %v599 = vadd.f32 %v587, %v592
        %v600 = vadd.f32 %v588, %v592
        %v601 = vpack.c.bf16 %v594, %v593
        %v602 = vpack.c.bf16 %v596, %v595
        %v603 = vpack.c.bf16 %v598, %v597
        %v604 = vpack.c.bf16 %v600, %v599
        %v605 = vld [vmem:[#allocation2] sm:$0xf]
        %v606 = vld [vmem:[#allocation2 + $0x4] sm:$0xf]
        %v607 = vld [vmem:[#allocation2 + $0x8] sm:$0xf]
        %v608 = vld [vmem:[#allocation2 + $0xc] sm:$0xf]
        %v613 = vunpack.c.l.b16 %v605
        %v614 = vunpack.c.l.b16 %v606
        %v615 = vunpack.c.l.b16 %v607
        %v616 = vunpack.c.l.b16 %v608
        %v617 = vpack.c.b16 %v614, %v613
        %v618 = vpack.c.b16 %v616, %v615
        %v622 = vsel %vm471, %v601, 0
        %v625 = vsel %vm471, %v602, 0
        %v628 = vsel %vm471, %v603, 0
        %v631 = vsel %vm471, %v604, 0
        %633 = vmatprep.subr.bf16.mxu0 0
        %634 = vmatpush1.bf16.msra.mxu0 %v617
        %635 = vmatprep.subr.bf16.mxu0 0
        %636 = vmatpush1.bf16.msra.mxu0 %v618
        %637 = vmatprep.subr.bf16.mxu0 0
        %638 = vmatpush1.bf16.msra.mxu0 0
        %639 = vmatprep.subr.bf16.mxu0 0
        %640 = vmatpush1.bf16.msra.mxu0 0
        %641 = vmatprep.subr.bf16.mxu0 0
        %642 = vmatpush1.bf16.msra.mxu0 0
        %643 = vmatprep.subr.bf16.mxu0 0
        %644 = vmatpush1.bf16.msra.mxu0 0
        %645 = vmatprep.subr.bf16.mxu0 0
        %646 = vmatpush1.bf16.msra.mxu0 0
        %647 = vmatprep.subr.bf16.mxu0 0
        %648 = vmatpush1.bf16.msra.mxu0 0
        %649 = vmatprep.subr.bf16.mxu0 0
        %650 = vmatpush1.bf16.msra.mxu0 0
        %651 = vmatprep.subr.bf16.mxu0 0
        %652 = vmatpush1.bf16.msra.mxu0 0
        %653 = vmatprep.subr.bf16.mxu0 0
        %654 = vmatpush1.bf16.msra.mxu0 0
        %655 = vmatprep.subr.bf16.mxu0 0
        %656 = vmatpush1.bf16.msra.mxu0 0
        %657 = vmatprep.subr.bf16.mxu0 0
        %658 = vmatpush1.bf16.msra.mxu0 0
        %659 = vmatprep.subr.bf16.mxu0 0
        %660 = vmatpush1.bf16.msra.mxu0 0
        %661 = vmatprep.subr.bf16.mxu0 0
        %662 = vmatpush1.bf16.msra.mxu0 0
        %663 = vmatprep.subr.bf16.mxu0 0
        %664 = vmatpush1.bf16.msra.mxu0 0
        %665 = vmatprep.mubr.bf16.mxu0 0
        %666 = vmatmul.mubr.bf16.gmra.mrb[0].mxu0 %v622
        %v667 = vpop.f32.mrb[0].mxu0
        %v668 = vadd.f32 0.0, %v667
        %v669 = vpop.f32.mrb[0].mxu0
        %v670 = vpop.f32.mrb[0].mxu0
        %v671 = vadd.f32 0.0, %v670
        %v672 = vpop.f32.mrb[0].mxu0
        %673 = vmatprep.mubr.bf16.mxu0 0
        %674 = vmatmul.mubr.bf16.gmra.mrb[0].mxu0 %v625
        %v675 = vpop.f32.mrb[0].mxu0
        %v676 = vadd.f32 0.0, %v675
        %v677 = vpop.f32.mrb[0].mxu0
        %v678 = vpop.f32.mrb[0].mxu0
        %v679 = vadd.f32 0.0, %v678
        %v680 = vpop.f32.mrb[0].mxu0
        %681 = vmatprep.mubr.bf16.mxu0 0
        %682 = vmatmul.mubr.bf16.gmra.mrb[0].mxu0 %v628
        %v683 = vpop.f32.mrb[0].mxu0
        %v684 = vadd.f32 0.0, %v683
        %v685 = vpop.f32.mrb[0].mxu0
        %v686 = vpop.f32.mrb[0].mxu0
        %v687 = vadd.f32 0.0, %v686
        %v688 = vpop.f32.mrb[0].mxu0
        %689 = vmatprep.mubr.bf16.mxu0 0
        %690 = vmatmul.mubr.bf16.gmra.mrb[0].mxu0 %v631
        %v691 = vpop.f32.mrb[0].mxu0
        %v692 = vadd.f32 0.0, %v691
        %v693 = vpop.f32.mrb[0].mxu0
        %v694 = vpop.f32.mrb[0].mxu0
        %v695 = vadd.f32 0.0, %v694
        %v696 = vpop.f32.mrb[0].mxu0
        %697 = vdwg.mxu0
        %v698 = vpack.c.bf16 %v671, %v668
        %v699 = vpack.c.bf16 %v679, %v676
        %v700 = vpack.c.bf16 %v687, %v684
        %v701 = vpack.c.bf16 %v695, %v692
        %v702 = vld [vmem:[#allocation5] sm:$0xf]
        %v703 = vld [vmem:[#allocation5 + $0x4] sm:$0xf]
        %v704 = vld [vmem:[#allocation5 + $0x8] sm:$0xf]
        %v705 = vld [vmem:[#allocation5 + $0xc] sm:$0xf]
        %v710 = vunpack.c.l.b16 %v702
        %v711 = vunpack.c.l.b16 %v703
        %v712 = vunpack.c.l.b16 %v704
        %v713 = vunpack.c.l.b16 %v705
        %v714 = vpack.c.b16 %v711, %v710
        %v715 = vpack.c.b16 %v713, %v712
        %718 = vmatprep.subr.bf16.mxu0 0
        %719 = vmatpush1.bf16.msra.mxu0 %v714
        %720 = vmatprep.subr.bf16.mxu0 0
        %721 = vmatpush1.bf16.msra.mxu0 %v715
        %722 = vmatprep.subr.bf16.mxu0 0
        %723 = vmatpush1.bf16.msra.mxu0 0
        %724 = vmatprep.subr.bf16.mxu0 0
        %725 = vmatpush1.bf16.msra.mxu0 0
        %726 = vmatprep.subr.bf16.mxu0 0
        %727 = vmatpush1.bf16.msra.mxu0 0
        %728 = vmatprep.subr.bf16.mxu0 0
        %729 = vmatpush1.bf16.msra.mxu0 0
        %730 = vmatprep.subr.bf16.mxu0 0
        %731 = vmatpush1.bf16.msra.mxu0 0
        %732 = vmatprep.subr.bf16.mxu0 0
        %733 = vmatpush1.bf16.msra.mxu0 0
        %734 = vmatprep.subr.bf16.mxu0 0
        %735 = vmatpush1.bf16.msra.mxu0 0
        %736 = vmatprep.subr.bf16.mxu0 0
        %737 = vmatpush1.bf16.msra.mxu0 0
        %738 = vmatprep.subr.bf16.mxu0 0
        %739 = vmatpush1.bf16.msra.mxu0 0
        %740 = vmatprep.subr.bf16.mxu0 0
        %741 = vmatpush1.bf16.msra.mxu0 0
        %742 = vmatprep.subr.bf16.mxu0 0
        %743 = vmatpush1.bf16.msra.mxu0 0
        %744 = vmatprep.subr.bf16.mxu0 0
        %745 = vmatpush1.bf16.msra.mxu0 0
        %746 = vmatprep.subr.bf16.mxu0 0
        %747 = vmatpush1.bf16.msra.mxu0 0
        %748 = vmatprep.subr.bf16.mxu0 0
        %749 = vmatpush1.bf16.msra.mxu0 0
        %750 = vmatprep.mubr.bf16.mxu0 0
        %751 = vmatmul.mubr.bf16.gmra.mrb[0].mxu0 %v622
        %v752 = vpop.f32.mrb[0].mxu0
        %v753 = vadd.f32 0.0, %v752
        %v754 = vpop.f32.mrb[0].mxu0
        %v755 = vpop.f32.mrb[0].mxu0
        %v756 = vadd.f32 0.0, %v755
        %v757 = vpop.f32.mrb[0].mxu0
        %758 = vmatprep.mubr.bf16.mxu0 0
        %759 = vmatmul.mubr.bf16.gmra.mrb[0].mxu0 %v625
        %v760 = vpop.f32.mrb[0].mxu0
        %v761 = vadd.f32 0.0, %v760
        %v762 = vpop.f32.mrb[0].mxu0
        %v763 = vpop.f32.mrb[0].mxu0
        %v764 = vadd.f32 0.0, %v763
        %v765 = vpop.f32.mrb[0].mxu0
        %766 = vmatprep.mubr.bf16.mxu0 0
        %767 = vmatmul.mubr.bf16.gmra.mrb[0].mxu0 %v628
        %v768 = vpop.f32.mrb[0].mxu0
        %v769 = vadd.f32 0.0, %v768
        %v770 = vpop.f32.mrb[0].mxu0
        %v771 = vpop.f32.mrb[0].mxu0
        %v772 = vadd.f32 0.0, %v771
        %v773 = vpop.f32.mrb[0].mxu0
        %774 = vmatprep.mubr.bf16.mxu0 0
        %775 = vmatmul.mubr.bf16.gmra.mrb[0].mxu0 %v631
        %v776 = vpop.f32.mrb[0].mxu0
        %v777 = vadd.f32 0.0, %v776
        %v778 = vpop.f32.mrb[0].mxu0
        %v779 = vpop.f32.mrb[0].mxu0
        %v780 = vadd.f32 0.0, %v779
        %v781 = vpop.f32.mrb[0].mxu0
        %782 = vdwg.mxu0
        %v783 = vpack.c.bf16 %v756, %v753
        %v784 = vpack.c.bf16 %v764, %v761
        %v785 = vpack.c.bf16 %v772, %v769
        %v786 = vpack.c.bf16 %v780, %v777
        %v787 = vld [vmem:[#allocation7] sm:$0xf]
        %v788 = vld [vmem:[#allocation7 + $0x4] sm:$0xf]
        %v789 = vld [vmem:[#allocation7 + $0x8] sm:$0xf]
        %v790 = vld [vmem:[#allocation7 + $0xc] sm:$0xf]
        %v795 = vunpack.c.l.b16 %v787
        %v796 = vunpack.c.l.b16 %v788
        %v797 = vunpack.c.l.b16 %v789
        %v798 = vunpack.c.l.b16 %v790
        %v799 = vpack.c.b16 %v796, %v795
        %v800 = vpack.c.b16 %v798, %v797
        %803 = vmatprep.subr.bf16.mxu0 0
        %804 = vmatpush1.bf16.msra.mxu0 %v799
        %805 = vmatprep.subr.bf16.mxu0 0
        %806 = vmatpush1.bf16.msra.mxu0 %v800
        %807 = vmatprep.subr.bf16.mxu0 0
        %808 = vmatpush1.bf16.msra.mxu0 0
        %809 = vmatprep.subr.bf16.mxu0 0
        %810 = vmatpush1.bf16.msra.mxu0 0
        %811 = vmatprep.subr.bf16.mxu0 0
        %812 = vmatpush1.bf16.msra.mxu0 0
        %813 = vmatprep.subr.bf16.mxu0 0
        %814 = vmatpush1.bf16.msra.mxu0 0
        %815 = vmatprep.subr.bf16.mxu0 0
        %816 = vmatpush1.bf16.msra.mxu0 0
        %817 = vmatprep.subr.bf16.mxu0 0
        %818 = vmatpush1.bf16.msra.mxu0 0
        %819 = vmatprep.subr.bf16.mxu0 0
        %820 = vmatpush1.bf16.msra.mxu0 0
        %821 = vmatprep.subr.bf16.mxu0 0
        %822 = vmatpush1.bf16.msra.mxu0 0
        %823 = vmatprep.subr.bf16.mxu0 0
        %824 = vmatpush1.bf16.msra.mxu0 0
        %825 = vmatprep.subr.bf16.mxu0 0
        %826 = vmatpush1.bf16.msra.mxu0 0
        %827 = vmatprep.subr.bf16.mxu0 0
        %828 = vmatpush1.bf16.msra.mxu0 0
        %829 = vmatprep.subr.bf16.mxu0 0
        %830 = vmatpush1.bf16.msra.mxu0 0
        %831 = vmatprep.subr.bf16.mxu0 0
        %832 = vmatpush1.bf16.msra.mxu0 0
        %833 = vmatprep.subr.bf16.mxu0 0
        %834 = vmatpush1.bf16.msra.mxu0 0
        %835 = vmatprep.mubr.bf16.mxu0 0
        %836 = vmatmul.mubr.bf16.gmra.mrb[0].mxu0 %v622
        %v837 = vpop.f32.mrb[0].mxu0
        %v838 = vadd.f32 0.0, %v837
        %v839 = vpop.f32.mrb[0].mxu0
        %v840 = vpop.f32.mrb[0].mxu0
        %v841 = vadd.f32 0.0, %v840
        %v842 = vpop.f32.mrb[0].mxu0
        %843 = vmatprep.mubr.bf16.mxu0 0
        %844 = vmatmul.mubr.bf16.gmra.mrb[0].mxu0 %v625
        %v845 = vpop.f32.mrb[0].mxu0
        %v846 = vadd.f32 0.0, %v845
        %v847 = vpop.f32.mrb[0].mxu0
        %v848 = vpop.f32.mrb[0].mxu0
        %v849 = vadd.f32 0.0, %v848
        %v850 = vpop.f32.mrb[0].mxu0
        %851 = vmatprep.mubr.bf16.mxu0 0
        %852 = vmatmul.mubr.bf16.gmra.mrb[0].mxu0 %v628
        %v853 = vpop.f32.mrb[0].mxu0
        %v854 = vadd.f32 0.0, %v853
        %v855 = vpop.f32.mrb[0].mxu0
        %v856 = vpop.f32.mrb[0].mxu0
        %v857 = vadd.f32 0.0, %v856
        %v858 = vpop.f32.mrb[0].mxu0
        %859 = vmatprep.mubr.bf16.mxu0 0
        %860 = vmatmul.mubr.bf16.gmra.mrb[0].mxu0 %v631
        %v861 = vpop.f32.mrb[0].mxu0
        %v862 = vadd.f32 0.0, %v861
        %v863 = vpop.f32.mrb[0].mxu0
        %v864 = vpop.f32.mrb[0].mxu0
        %v865 = vadd.f32 0.0, %v864
        %v866 = vpop.f32.mrb[0].mxu0
        %867 = vdwg.mxu0
        %v868 = vpack.c.bf16 %v841, %v838
        %v869 = vpack.c.bf16 %v849, %v846
        %v870 = vpack.c.bf16 %v857, %v854
        %v871 = vpack.c.bf16 %v865, %v862
        %v872 = vld [vmem:[%s9] sm:$0xf]
        %v873 = vld [vmem:[%s9 + $0x4] sm:$0xf]
        %v874 = vld [vmem:[%s9 + $0x8] sm:$0xf]
        %v875 = vld [vmem:[%s9 + $0xc] sm:$0xf]
        %v876 = vld [vmem:[%s9 + $0x10] sm:$0xf]
        %v877 = vld [vmem:[%s9 + $0x14] sm:$0xf]
        %v878 = vld [vmem:[%s9 + $0x18] sm:$0xf]
        %v879 = vld [vmem:[%s9 + $0x1c] sm:$0xf]
        %v880 = vld [vmem:[%s9 + $0x20] sm:$0xf]
        %v881 = vld [vmem:[%s9 + $0x24] sm:$0xf]
        %v882 = vld [vmem:[%s9 + $0x28] sm:$0xf]
        %v883 = vld [vmem:[%s9 + $0x2c] sm:$0xf]
        %v884 = vld [vmem:[%s9 + $0x30] sm:$0xf]
        %v885 = vld [vmem:[%s9 + $0x34] sm:$0xf]
        %v886 = vld [vmem:[%s9 + $0x38] sm:$0xf]
        %v887 = vld [vmem:[%s9 + $0x3c] sm:$0xf]
        %v888 = vld [vmem:[%s9 + $0x40] sm:$0xf]
        %v889 = vld [vmem:[%s9 + $0x44] sm:$0xf]
        %v890 = vld [vmem:[%s9 + $0x48] sm:$0xf]
        %v891 = vld [vmem:[%s9 + $0x4c] sm:$0xf]
        %v892 = vld [vmem:[%s9 + $0x50] sm:$0xf]
        %v893 = vld [vmem:[%s9 + $0x54] sm:$0xf]
        %v894 = vld [vmem:[%s9 + $0x58] sm:$0xf]
        %v895 = vld [vmem:[%s9 + $0x5c] sm:$0xf]
        %v896 = vld [vmem:[%s9 + $0x60] sm:$0xf]
        %v897 = vld [vmem:[%s9 + $0x64] sm:$0xf]
        %v898 = vld [vmem:[%s9 + $0x68] sm:$0xf]
        %v899 = vld [vmem:[%s9 + $0x6c] sm:$0xf]
        %v900 = vld [vmem:[%s9 + $0x70] sm:$0xf]
        %v901 = vld [vmem:[%s9 + $0x74] sm:$0xf]
        %v902 = vld [vmem:[%s9 + $0x78] sm:$0xf]
        %v903 = vld [vmem:[%s9 + $0x7c] sm:$0xf]
        %v936 = vunpack.c.l.b16 %v872
        %v937 = vunpack.c.l.b16 %v873
        %v938 = vunpack.c.l.b16 %v874
        %v939 = vunpack.c.l.b16 %v875
        %v940 = vunpack.c.l.b16 %v876
        %v941 = vunpack.c.l.b16 %v877
        %v942 = vunpack.c.l.b16 %v878
        %v943 = vunpack.c.l.b16 %v879
        %v944 = vunpack.c.l.b16 %v880
        %v945 = vunpack.c.l.b16 %v881
        %v946 = vunpack.c.l.b16 %v882
        %v947 = vunpack.c.l.b16 %v883
        %v948 = vunpack.c.l.b16 %v884
        %v949 = vunpack.c.l.b16 %v885
        %v950 = vunpack.c.l.b16 %v886
        %v951 = vunpack.c.l.b16 %v887
        %v952 = vunpack.c.l.b16 %v888
        %v953 = vunpack.c.l.b16 %v889
        %v954 = vunpack.c.l.b16 %v890
        %v955 = vunpack.c.l.b16 %v891
        %v956 = vunpack.c.l.b16 %v892
        %v957 = vunpack.c.l.b16 %v893
        %v958 = vunpack.c.l.b16 %v894
        %v959 = vunpack.c.l.b16 %v895
        %v960 = vunpack.c.l.b16 %v896
        %v961 = vunpack.c.l.b16 %v897
        %v962 = vunpack.c.l.b16 %v898
        %v963 = vunpack.c.l.b16 %v899
        %v964 = vunpack.c.l.b16 %v900
        %v965 = vunpack.c.l.b16 %v901
        %v966 = vunpack.c.l.b16 %v902
        %v967 = vunpack.c.l.b16 %v903
        %v968 = vpack.c.b16 %v937, %v936
        %v969 = vpack.c.b16 %v939, %v938
        %v970 = vpack.c.b16 %v941, %v940
        %v971 = vpack.c.b16 %v943, %v942
        %v972 = vpack.c.b16 %v945, %v944
        %v973 = vpack.c.b16 %v947, %v946
        %v974 = vpack.c.b16 %v949, %v948
        %v975 = vpack.c.b16 %v951, %v950
        %v976 = vpack.c.b16 %v953, %v952
        %v977 = vpack.c.b16 %v955, %v954
        %v978 = vpack.c.b16 %v957, %v956
        %v979 = vpack.c.b16 %v959, %v958
        %v980 = vpack.c.b16 %v961, %v960
        %v981 = vpack.c.b16 %v963, %v962
        %v982 = vpack.c.b16 %v965, %v964
        %v983 = vpack.c.b16 %v967, %v966
        %v1000 = vmul.bf16 %v783, %v968
        %v1001 = vmul.bf16 %v784, %v969
        %v1002 = vmul.bf16 %v785, %v970
        %v1003 = vmul.bf16 %v786, %v971
        %v1004 = vmul.bf16 %v783, %v972
        %v1005 = vmul.bf16 %v784, %v973
        %v1006 = vmul.bf16 %v785, %v974
        %v1007 = vmul.bf16 %v786, %v975
        %v1008 = vmul.bf16 %v783, %v976
        %v1009 = vmul.bf16 %v784, %v977
        %v1010 = vmul.bf16 %v785, %v978
        %v1011 = vmul.bf16 %v786, %v979
        %v1012 = vmul.bf16 %v783, %v980
        %v1013 = vmul.bf16 %v784, %v981
        %v1014 = vmul.bf16 %v785, %v982
        %v1015 = vmul.bf16 %v786, %v983
        %v1016 = vmul.bf16 %v868, %v968
        %v1017 = vmul.bf16 %v869, %v969
        %v1018 = vmul.bf16 %v870, %v970
        %v1019 = vmul.bf16 %v871, %v971
        %v1020 = vmul.bf16 %v868, %v972
        %v1021 = vmul.bf16 %v869, %v973
        %v1022 = vmul.bf16 %v870, %v974
        %v1023 = vmul.bf16 %v871, %v975
        %v1024 = vmul.bf16 %v868, %v976
        %v1025 = vmul.bf16 %v869, %v977
        %v1026 = vmul.bf16 %v870, %v978
        %v1027 = vmul.bf16 %v871, %v979
        %v1028 = vmul.bf16 %v868, %v980
        %v1029 = vmul.bf16 %v869, %v981
        %v1030 = vmul.bf16 %v870, %v982
        %v1031 = vmul.bf16 %v871, %v983
        %v1032 = vld [vmem:[%s10] sm:$0xff]
        %v1033 = vld [vmem:[%s10 + $0x8] sm:$0xff]
        %v1034 = vld [vmem:[%s10 + $0x10] sm:$0xff]
        %v1035 = vld [vmem:[%s10 + $0x18] sm:$0xff]
        %v1036 = vld [vmem:[%s10 + $0x20] sm:$0xff]
        %v1037 = vld [vmem:[%s10 + $0x28] sm:$0xff]
        %v1038 = vld [vmem:[%s10 + $0x30] sm:$0xff]
        %v1039 = vld [vmem:[%s10 + $0x38] sm:$0xff]
        %v1040 = vld [vmem:[%s10 + $0x40] sm:$0xff]
        %v1041 = vld [vmem:[%s10 + $0x48] sm:$0xff]
        %v1042 = vld [vmem:[%s10 + $0x50] sm:$0xff]
        %v1043 = vld [vmem:[%s10 + $0x58] sm:$0xff]
        %v1044 = vld [vmem:[%s10 + $0x60] sm:$0xff]
        %v1045 = vld [vmem:[%s10 + $0x68] sm:$0xff]
        %v1046 = vld [vmem:[%s10 + $0x70] sm:$0xff]
        %v1047 = vld [vmem:[%s10 + $0x78] sm:$0xff]
        %v1049 = vsel %vm471, %v698, 0
        %v1052 = vsel %vm471, %v699, 0
        %v1055 = vsel %vm471, %v700, 0
        %v1058 = vsel %vm471, %v701, 0
        %v1061 = vsel %vm471, %v1000, 0
        %v1064 = vsel %vm471, %v1001, 0
        %v1067 = vsel %vm471, %v1002, 0
        %v1070 = vsel %vm471, %v1003, 0
        %v1073 = vsel %vm471, %v1004, 0
        %v1076 = vsel %vm471, %v1005, 0
        %v1079 = vsel %vm471, %v1006, 0
        %v1082 = vsel %vm471, %v1007, 0
        %v1085 = vsel %vm471, %v1008, 0
        %v1088 = vsel %vm471, %v1009, 0
        %v1091 = vsel %vm471, %v1010, 0
        %v1094 = vsel %vm471, %v1011, 0
        %v1097 = vsel %vm471, %v1012, 0
        %v1100 = vsel %vm471, %v1013, 0
        %v1103 = vsel %vm471, %v1014, 0
        %v1106 = vsel %vm471, %v1015, 0
        %1108 = vmatprep.subr.bf16.mxu0 0
        %1109 = vmatpush1.bf16.xpose.msra.mxu0 %v1061
        %1110 = vmatprep.subr.bf16.mxu0 0
        %1111 = vmatpush1.bf16.xpose.msra.mxu0 %v1064
        %1112 = vmatprep.subr.bf16.mxu0 0
        %1113 = vmatpush1.bf16.xpose.msra.mxu0 %v1067
        %1114 = vmatprep.subr.bf16.mxu0 0
        %1115 = vmatpush1.bf16.xpose.msra.mxu0 %v1070
        %1116 = vmatprep.subr.bf16.mxu0 0
        %1117 = vmatpush1.bf16.xpose.msra.mxu0 %v1073
        %1118 = vmatprep.subr.bf16.mxu0 0
        %1119 = vmatpush1.bf16.xpose.msra.mxu0 %v1076
        %1120 = vmatprep.subr.bf16.mxu0 0
        %1121 = vmatpush1.bf16.xpose.msra.mxu0 %v1079
        %1122 = vmatprep.subr.bf16.mxu0 0
        %1123 = vmatpush1.bf16.xpose.msra.mxu0 %v1082
        %1124 = vmatprep.subr.bf16.mxu0 0
        %1125 = vmatpush1.bf16.xpose.msra.mxu0 %v1085
        %1126 = vmatprep.subr.bf16.mxu0 0
        %1127 = vmatpush1.bf16.xpose.msra.mxu0 %v1088
        %1128 = vmatprep.subr.bf16.mxu0 0
        %1129 = vmatpush1.bf16.xpose.msra.mxu0 %v1091
        %1130 = vmatprep.subr.bf16.mxu0 0
        %1131 = vmatpush1.bf16.xpose.msra.mxu0 %v1094
        %1132 = vmatprep.subr.bf16.mxu0 0
        %1133 = vmatpush1.bf16.xpose.msra.mxu0 %v1097
        %1134 = vmatprep.subr.bf16.mxu0 0
        %1135 = vmatpush1.bf16.xpose.msra.mxu0 %v1100
        %1136 = vmatprep.subr.bf16.mxu0 0
        %1137 = vmatpush1.bf16.xpose.msra.mxu0 %v1103
        %1138 = vmatprep.subr.bf16.mxu0 0
        %1139 = vmatpush1.bf16.xpose.msra.mxu0 %v1106
        %1140 = vmatprep.mubr.bf16.mxu0 0
        %1141 = vmatmul.mubr.bf16.gmra.mrb[0].mxu0 %v1049
        %v1142 = vpop.f32.mrb[0].mxu0
        %v1143 = vadd.f32 %v1032, %v1142
        %v1144 = vpop.f32.mrb[0].mxu0
        %v1145 = vadd.f32 %v1033, %v1144
        %v1146 = vpop.f32.mrb[0].mxu0
        %v1147 = vadd.f32 %v1034, %v1146
        %v1148 = vpop.f32.mrb[0].mxu0
        %v1149 = vadd.f32 %v1035, %v1148
        %1150 = vmatprep.mubr.bf16.mxu0 0
        %1151 = vmatmul.mubr.bf16.gmra.mrb[0].mxu0 %v1052
        %v1152 = vpop.f32.mrb[0].mxu0
        %v1153 = vadd.f32 %v1036, %v1152
        %v1154 = vpop.f32.mrb[0].mxu0
        %v1155 = vadd.f32 %v1037, %v1154
        %v1156 = vpop.f32.mrb[0].mxu0
        %v1157 = vadd.f32 %v1038, %v1156
        %v1158 = vpop.f32.mrb[0].mxu0
        %v1159 = vadd.f32 %v1039, %v1158
        %1160 = vmatprep.mubr.bf16.mxu0 0
        %1161 = vmatmul.mubr.bf16.gmra.mrb[0].mxu0 %v1055
        %v1162 = vpop.f32.mrb[0].mxu0
        %v1163 = vadd.f32 %v1040, %v1162
        %v1164 = vpop.f32.mrb[0].mxu0
        %v1165 = vadd.f32 %v1041, %v1164
        %v1166 = vpop.f32.mrb[0].mxu0
        %v1167 = vadd.f32 %v1042, %v1166
        %v1168 = vpop.f32.mrb[0].mxu0
        %v1169 = vadd.f32 %v1043, %v1168
        %1170 = vmatprep.mubr.bf16.mxu0 0
        %1171 = vmatmul.mubr.bf16.gmra.mrb[0].mxu0 %v1058
        %v1172 = vpop.f32.mrb[0].mxu0
        %v1173 = vadd.f32 %v1044, %v1172
        %v1174 = vpop.f32.mrb[0].mxu0
        %v1175 = vadd.f32 %v1045, %v1174
        %v1176 = vpop.f32.mrb[0].mxu0
        %v1177 = vadd.f32 %v1046, %v1176
        %v1178 = vpop.f32.mrb[0].mxu0
        %v1179 = vadd.f32 %v1047, %v1178
        %1180 = vdwg.mxu0
        %v1181 = vmax.f32 %v1143, %v1145
        %1182 = vmax.xlane.f32.xlu0 %v1181
        %v1183 = vpop.xlane.xlu0 %1182
        %v1184 = vmax.f32 %v1147, %v1149
        %1185 = vmax.xlane.f32.xlu0 %v1184
        %v1186 = vpop.xlane.xlu0 %1185
        %v1187 = vmax.f32 %v1153, %v1155
        %1188 = vmax.xlane.f32.xlu0 %v1187
        %v1189 = vpop.xlane.xlu0 %1188
        %v1190 = vmax.f32 %v1157, %v1159
        %1191 = vmax.xlane.f32.xlu0 %v1190
        %v1192 = vpop.xlane.xlu0 %1191
        %v1193 = vmax.f32 %v1163, %v1165
        %1194 = vmax.xlane.f32.xlu0 %v1193
        %v1195 = vpop.xlane.xlu0 %1194
        %v1196 = vmax.f32 %v1167, %v1169
        %1197 = vmax.xlane.f32.xlu0 %v1196
        %v1198 = vpop.xlane.xlu0 %1197
        %v1199 = vmax.f32 %v1173, %v1175
        %1200 = vmax.xlane.f32.xlu0 %v1199
        %v1201 = vpop.xlane.xlu0 %1200
        %v1202 = vmax.f32 %v1177, %v1179
        %1203 = vmax.xlane.f32.xlu0 %v1202
        %v1204 = vpop.xlane.xlu0 %1203
        %v1205 = vsub.f32 %v1143, %v1183
        %v1206 = vsub.f32 %v1145, %v1183
        %v1207 = vsub.f32 %v1147, %v1186
        %v1208 = vsub.f32 %v1149, %v1186
        %v1209 = vsub.f32 %v1153, %v1189
        %v1210 = vsub.f32 %v1155, %v1189
        %v1211 = vsub.f32 %v1157, %v1192
        %v1212 = vsub.f32 %v1159, %v1192
        %v1213 = vsub.f32 %v1163, %v1195
        %v1214 = vsub.f32 %v1165, %v1195
        %v1215 = vsub.f32 %v1167, %v1198
        %v1216 = vsub.f32 %v1169, %v1198
        %v1217 = vsub.f32 %v1173, %v1201
        %v1218 = vsub.f32 %v1175, %v1201
        %v1219 = vsub.f32 %v1177, %v1204
        %v1220 = vsub.f32 %v1179, %v1204
        %v1221 = vmul.f32 %v1205, 1.442695
        %v1222 = vpow.pop %v1221
        %v1223 = vmul.f32 %v1206, 1.442695
        %v1224 = vpow.pop %v1223
        %v1225 = vmul.f32 %v1207, 1.442695
        %v1226 = vpow.pop %v1225
        %v1227 = vmul.f32 %v1208, 1.442695
        %v1228 = vpow.pop %v1227
        %v1229 = vmul.f32 %v1209, 1.442695
        %v1230 = vpow.pop %v1229
        %v1231 = vmul.f32 %v1210, 1.442695
        %v1232 = vpow.pop %v1231
        %v1233 = vmul.f32 %v1211, 1.442695
        %v1234 = vpow.pop %v1233
        %v1235 = vmul.f32 %v1212, 1.442695
        %v1236 = vpow.pop %v1235
        %v1237 = vmul.f32 %v1213, 1.442695
        %v1238 = vpow.pop %v1237
        %v1239 = vmul.f32 %v1214, 1.442695
        %v1240 = vpow.pop %v1239
        %v1241 = vmul.f32 %v1215, 1.442695
        %v1242 = vpow.pop %v1241
        %v1243 = vmul.f32 %v1216, 1.442695
        %v1244 = vpow.pop %v1243
        %v1245 = vmul.f32 %v1217, 1.442695
        %v1246 = vpow.pop %v1245
        %v1247 = vmul.f32 %v1218, 1.442695
        %v1248 = vpow.pop %v1247
        %v1249 = vmul.f32 %v1219, 1.442695
        %v1250 = vpow.pop %v1249
        %v1251 = vmul.f32 %v1220, 1.442695
        %v1252 = vpow.pop %v1251
        %v1253 = vpack.c.bf16 %v1226, %v1222
        %v1254 = vpack.c.bf16 %v1228, %v1224
        %v1255 = vpack.c.bf16 %v1234, %v1230
        %v1256 = vpack.c.bf16 %v1236, %v1232
        %v1257 = vpack.c.bf16 %v1242, %v1238
        %v1258 = vpack.c.bf16 %v1244, %v1240
        %v1259 = vpack.c.bf16 %v1250, %v1246
        %v1260 = vpack.c.bf16 %v1252, %v1248
        %1261 = vmatprep.subr.bf16.mxu0 0
        %1262 = vmatpush1.bf16.msra.mxu0 %v1016
        %1263 = vmatprep.subr.bf16.mxu0 0
        %1264 = vmatpush1.bf16.msra.mxu0 %v1017
        %1265 = vmatprep.subr.bf16.mxu0 0
        %1266 = vmatpush1.bf16.msra.mxu0 %v1018
        %1267 = vmatprep.subr.bf16.mxu0 0
        %1268 = vmatpush1.bf16.msra.mxu0 %v1019
        %1269 = vmatprep.subr.bf16.mxu0 0
        %1270 = vmatpush1.bf16.msra.mxu0 %v1020
        %1271 = vmatprep.subr.bf16.mxu0 0
        %1272 = vmatpush1.bf16.msra.mxu0 %v1021
        %1273 = vmatprep.subr.bf16.mxu0 0
        %1274 = vmatpush1.bf16.msra.mxu0 %v1022
        %1275 = vmatprep.subr.bf16.mxu0 0
        %1276 = vmatpush1.bf16.msra.mxu0 %v1023
        %1277 = vmatprep.subr.bf16.mxu0 0
        %1278 = vmatpush1.bf16.msra.mxu0 %v1024
        %1279 = vmatprep.subr.bf16.mxu0 0
        %1280 = vmatpush1.bf16.msra.mxu0 %v1025
        %1281 = vmatprep.subr.bf16.mxu0 0
        %1282 = vmatpush1.bf16.msra.mxu0 %v1026
        %1283 = vmatprep.subr.bf16.mxu0 0
        %1284 = vmatpush1.bf16.msra.mxu0 %v1027
        %1285 = vmatprep.subr.bf16.mxu0 0
        %1286 = vmatpush1.bf16.msra.mxu0 %v1028
        %1287 = vmatprep.subr.bf16.mxu0 0
        %1288 = vmatpush1.bf16.msra.mxu0 %v1029
        %1289 = vmatprep.subr.bf16.mxu0 0
        %1290 = vmatpush1.bf16.msra.mxu0 %v1030
        %1291 = vmatprep.subr.bf16.mxu0 0
        %1292 = vmatpush1.bf16.msra.mxu0 %v1031
        %1293 = vmatprep.mubr.bf16.mxu0 %v1254
        %1294 = vmatmul.mubr.bf16.gmra.mrb[0].mxu0 %v1253
        %v1295 = vpop.f32.mrb[0].mxu0
        %v1296 = vadd.f32 0.0, %v1295
        %v1297 = vpop.f32.mrb[0].mxu0
        %v1298 = vpop.f32.mrb[0].mxu0
        %v1299 = vadd.f32 0.0, %v1298
        %v1300 = vpop.f32.mrb[0].mxu0
        %1301 = vmatprep.mubr.bf16.mxu0 %v1256
        %1302 = vmatmul.mubr.bf16.gmra.mrb[0].mxu0 %v1255
        %v1303 = vpop.f32.mrb[0].mxu0
        %v1304 = vadd.f32 0.0, %v1303
        %v1305 = vpop.f32.mrb[0].mxu0
        %v1306 = vpop.f32.mrb[0].mxu0
        %v1307 = vadd.f32 0.0, %v1306
        %v1308 = vpop.f32.mrb[0].mxu0
        %1309 = vmatprep.mubr.bf16.mxu0 %v1258
        %1310 = vmatmul.mubr.bf16.gmra.mrb[0].mxu0 %v1257
        %v1311 = vpop.f32.mrb[0].mxu0
        %v1312 = vadd.f32 0.0, %v1311
        %v1313 = vpop.f32.mrb[0].mxu0
        %v1314 = vpop.f32.mrb[0].mxu0
        %v1315 = vadd.f32 0.0, %v1314
        %v1316 = vpop.f32.mrb[0].mxu0
        %1317 = vmatprep.mubr.bf16.mxu0 %v1260
        %1318 = vmatmul.mubr.bf16.gmra.mrb[0].mxu0 %v1259
        %v1319 = vpop.f32.mrb[0].mxu0
        %v1320 = vadd.f32 0.0, %v1319
        %v1321 = vpop.f32.mrb[0].mxu0
        %v1322 = vpop.f32.mrb[0].mxu0
        %v1323 = vadd.f32 0.0, %v1322
        %v1324 = vpop.f32.mrb[0].mxu0
        %1325 = vdwg.mxu0
        %1326 = vmatprep.subr.bf16.mxu0 0
        %1327 = vmatpush1.bf16.msra.mxu0 %v968
        %1328 = vmatprep.subr.bf16.mxu0 0
        %1329 = vmatpush1.bf16.msra.mxu0 %v969
        %1330 = vmatprep.subr.bf16.mxu0 0
        %1331 = vmatpush1.bf16.msra.mxu0 %v970
        %1332 = vmatprep.subr.bf16.mxu0 0
        %1333 = vmatpush1.bf16.msra.mxu0 %v971
        %1334 = vmatprep.subr.bf16.mxu0 0
        %1335 = vmatpush1.bf16.msra.mxu0 %v972
        %1336 = vmatprep.subr.bf16.mxu0 0
        %1337 = vmatpush1.bf16.msra.mxu0 %v973
        %1338 = vmatprep.subr.bf16.mxu0 0
        %1339 = vmatpush1.bf16.msra.mxu0 %v974
        %1340 = vmatprep.subr.bf16.mxu0 0
        %1341 = vmatpush1.bf16.msra.mxu0 %v975
        %1342 = vmatprep.subr.bf16.mxu0 0
        %1343 = vmatpush1.bf16.msra.mxu0 %v976
        %1344 = vmatprep.subr.bf16.mxu0 0
        %1345 = vmatpush1.bf16.msra.mxu0 %v977
        %1346 = vmatprep.subr.bf16.mxu0 0
        %1347 = vmatpush1.bf16.msra.mxu0 %v978
        %1348 = vmatprep.subr.bf16.mxu0 0
        %1349 = vmatpush1.bf16.msra.mxu0 %v979
        %1350 = vmatprep.subr.bf16.mxu0 0
        %1351 = vmatpush1.bf16.msra.mxu0 %v980
        %1352 = vmatprep.subr.bf16.mxu0 0
        %1353 = vmatpush1.bf16.msra.mxu0 %v981
        %1354 = vmatprep.subr.bf16.mxu0 0
        %1355 = vmatpush1.bf16.msra.mxu0 %v982
        %1356 = vmatprep.subr.bf16.mxu0 0
        %1357 = vmatpush1.bf16.msra.mxu0 %v983
        %1358 = vmatprep.mubr.bf16.mxu0 %v1254
        %1359 = vmatmul.mubr.bf16.gmra.mrb[0].mxu0 %v1253
        %v1360 = vpop.f32.mrb[0].mxu0
        %v1361 = vadd.f32 0.0, %v1360
        %v1362 = vpop.f32.mrb[0].mxu0
        %v1363 = vpop.f32.mrb[0].mxu0
        %v1364 = vadd.f32 0.0, %v1363
        %v1365 = vpop.f32.mrb[0].mxu0
        %1366 = vmatprep.mubr.bf16.mxu0 %v1256
        %1367 = vmatmul.mubr.bf16.gmra.mrb[0].mxu0 %v1255
        %v1368 = vpop.f32.mrb[0].mxu0
        %v1369 = vadd.f32 0.0, %v1368
        %v1370 = vpop.f32.mrb[0].mxu0
        %v1371 = vpop.f32.mrb[0].mxu0
        %v1372 = vadd.f32 0.0, %v1371
        %v1373 = vpop.f32.mrb[0].mxu0
        %1374 = vmatprep.mubr.bf16.mxu0 %v1258
        %1375 = vmatmul.mubr.bf16.gmra.mrb[0].mxu0 %v1257
        %v1376 = vpop.f32.mrb[0].mxu0
        %v1377 = vadd.f32 0.0, %v1376
        %v1378 = vpop.f32.mrb[0].mxu0
        %v1379 = vpop.f32.mrb[0].mxu0
        %v1380 = vadd.f32 0.0, %v1379
        %v1381 = vpop.f32.mrb[0].mxu0
        %1382 = vmatprep.mubr.bf16.mxu0 %v1260
        %1383 = vmatmul.mubr.bf16.gmra.mrb[0].mxu0 %v1259
        %v1384 = vpop.f32.mrb[0].mxu0
        %v1385 = vadd.f32 0.0, %v1384
        %v1386 = vpop.f32.mrb[0].mxu0
        %v1387 = vpop.f32.mrb[0].mxu0
        %v1388 = vadd.f32 0.0, %v1387
        %v1389 = vpop.f32.mrb[0].mxu0
        %1390 = vdwg.mxu0
        %v1391 = vmax.f32 %v1361, 1e-30
        %v1392 = vmax.f32 %v1364, 1e-30
        %v1393 = vmax.f32 %v1369, 1e-30
        %v1394 = vmax.f32 %v1372, 1e-30
        %v1395 = vmax.f32 %v1377, 1e-30
        %v1396 = vmax.f32 %v1380, 1e-30
        %v1397 = vmax.f32 %v1385, 1e-30
        %v1398 = vmax.f32 %v1388, 1e-30
        %v1399 = vrcp.pop %v1391
        %v1400 = vrcp.pop %v1392
        %v1401 = vrcp.pop %v1393
        %v1402 = vrcp.pop %v1394
        %v1403 = vrcp.pop %v1395
        %v1404 = vrcp.pop %v1396
        %v1405 = vrcp.pop %v1397
        %v1406 = vrcp.pop %v1398
        %v1407 = vmul.f32 %v1296, %v1399
        %v1408 = vmul.f32 %v1299, %v1400
        %v1409 = vmul.f32 %v1304, %v1401
        %v1410 = vmul.f32 %v1307, %v1402
        %v1411 = vmul.f32 %v1312, %v1403
        %v1412 = vmul.f32 %v1315, %v1404
        %v1413 = vmul.f32 %v1320, %v1405
        %v1414 = vmul.f32 %v1323, %v1406
        %v1415 = vpack.c.bf16 %v1408, %v1407
        %v1416 = vpack.c.bf16 %v1410, %v1409
        %v1417 = vpack.c.bf16 %v1412, %v1411
        %v1418 = vpack.c.bf16 %v1414, %v1413
        %v1419 = vld [vmem:[#allocation8] sm:$0xf]
        %v1420 = vld [vmem:[#allocation8 + $0x4] sm:$0xf]
        %v1421 = vld [vmem:[#allocation8 + $0x8] sm:$0xf]
        %v1422 = vld [vmem:[#allocation8 + $0xc] sm:$0xf]
        %v1423 = vlaneseq
        %v1424 = vshrl.u32 %v1423, 7
        %v1425 = vsub.s32 2, %v1424
        %v1426 = vrot.slane %v470, %v1425
        %v1431 = vunpack.c.l.b16 %v1419
        %v1432 = vunpack.c.l.b16 %v1420
        %v1433 = vunpack.c.l.b16 %v1421
        %v1434 = vunpack.c.l.b16 %v1422
        %v1435 = vpack.c.b16 %v1432, %v1431
        %v1436 = vpack.c.b16 %v1434, %v1433
        %v1440 = vsel %vm471, %v1415, 0
        %v1443 = vsel %vm471, %v1416, 0
        %v1446 = vsel %vm471, %v1417, 0
        %v1449 = vsel %vm471, %v1418, 0
        %1451 = vmatprep.subr.bf16.mxu0 0
        %1452 = vmatpush1.bf16.msra.mxu0 %v1435
        %1453 = vmatprep.subr.bf16.mxu0 0
        %1454 = vmatpush1.bf16.msra.mxu0 %v1436
        %1455 = vmatprep.subr.bf16.mxu0 0
        %1456 = vmatpush1.bf16.msra.mxu0 0
        %1457 = vmatprep.subr.bf16.mxu0 0
        %1458 = vmatpush1.bf16.msra.mxu0 0
        %1459 = vmatprep.subr.bf16.mxu0 0
        %1460 = vmatpush1.bf16.msra.mxu0 0
        %1461 = vmatprep.subr.bf16.mxu0 0
        %1462 = vmatpush1.bf16.msra.mxu0 0
        %1463 = vmatprep.subr.bf16.mxu0 0
        %1464 = vmatpush1.bf16.msra.mxu0 0
        %1465 = vmatprep.subr.bf16.mxu0 0
        %1466 = vmatpush1.bf16.msra.mxu0 0
        %1467 = vmatprep.subr.bf16.mxu0 0
        %1468 = vmatpush1.bf16.msra.mxu0 0
        %1469 = vmatprep.subr.bf16.mxu0 0
        %1470 = vmatpush1.bf16.msra.mxu0 0
        %1471 = vmatprep.subr.bf16.mxu0 0
        %1472 = vmatpush1.bf16.msra.mxu0 0
        %1473 = vmatprep.subr.bf16.mxu0 0
        %1474 = vmatpush1.bf16.msra.mxu0 0
        %1475 = vmatprep.subr.bf16.mxu0 0
        %1476 = vmatpush1.bf16.msra.mxu0 0
        %1477 = vmatprep.subr.bf16.mxu0 0
        %1478 = vmatpush1.bf16.msra.mxu0 0
        %1479 = vmatprep.subr.bf16.mxu0 0
        %1480 = vmatpush1.bf16.msra.mxu0 0
        %1481 = vmatprep.subr.bf16.mxu0 0
        %1482 = vmatpush1.bf16.msra.mxu0 0
        %1483 = vmatprep.mubr.bf16.mxu0 0
        %1484 = vmatmul.mubr.bf16.gmra.mrb[0].mxu0 %v1440
        %v1485 = vpop.f32.mrb[0].mxu0
        %v1486 = vadd.f32 %v1426, %v1485
        %v1487 = vpop.f32.mrb[0].mxu0
        %v1488 = vpop.f32.mrb[0].mxu0
        %v1489 = vadd.f32 %v1426, %v1488
        %v1490 = vpop.f32.mrb[0].mxu0
        %1491 = vmatprep.mubr.bf16.mxu0 0
        %1492 = vmatmul.mubr.bf16.gmra.mrb[0].mxu0 %v1443
        %v1493 = vpop.f32.mrb[0].mxu0
        %v1494 = vadd.f32 %v1426, %v1493
        %v1495 = vpop.f32.mrb[0].mxu0
        %v1496 = vpop.f32.mrb[0].mxu0
        %v1497 = vadd.f32 %v1426, %v1496
        %v1498 = vpop.f32.mrb[0].mxu0
        %1499 = vmatprep.mubr.bf16.mxu0 0
        %1500 = vmatmul.mubr.bf16.gmra.mrb[0].mxu0 %v1446
        %v1501 = vpop.f32.mrb[0].mxu0
        %v1502 = vadd.f32 %v1426, %v1501
        %v1503 = vpop.f32.mrb[0].mxu0
        %v1504 = vpop.f32.mrb[0].mxu0
        %v1505 = vadd.f32 %v1426, %v1504
        %v1506 = vpop.f32.mrb[0].mxu0
        %1507 = vmatprep.mubr.bf16.mxu0 0
        %1508 = vmatmul.mubr.bf16.gmra.mrb[0].mxu0 %v1449
        %v1509 = vpop.f32.mrb[0].mxu0
        %v1510 = vadd.f32 %v1426, %v1509
        %v1511 = vpop.f32.mrb[0].mxu0
        %v1512 = vpop.f32.mrb[0].mxu0
        %v1513 = vadd.f32 %v1426, %v1512
        %v1514 = vpop.f32.mrb[0].mxu0
        %1515 = vdwg.mxu0
        %v1516 = vadd.f32 %v462, %v1486
        %v1517 = vadd.f32 %v463, %v1489
        %v1518 = vadd.f32 %v464, %v1494
        %v1519 = vadd.f32 %v465, %v1497
        %v1520 = vadd.f32 %v466, %v1502
        %v1521 = vadd.f32 %v467, %v1505
        %v1522 = vadd.f32 %v468, %v1510
        %v1523 = vadd.f32 %v469, %v1513
        %v1524 = vsel %vm471, %v1516, 0.0
        %1525 = vadd.xlane.f32.xlu0 %v1524
        %v1526 = vpop.xlane.xlu0 %1525
        %v1527 = vsel %vm471, %v1517, 0.0
        %1528 = vadd.xlane.f32.xlu0 %v1527
        %v1529 = vpop.xlane.xlu0 %1528
        %v1530 = vsel %vm471, %v1518, 0.0
        %1531 = vadd.xlane.f32.xlu0 %v1530
        %v1532 = vpop.xlane.xlu0 %1531
        %v1533 = vsel %vm471, %v1519, 0.0
        %1534 = vadd.xlane.f32.xlu0 %v1533
        %v1535 = vpop.xlane.xlu0 %1534
        %v1536 = vsel %vm471, %v1520, 0.0
        %1537 = vadd.xlane.f32.xlu0 %v1536
        %v1538 = vpop.xlane.xlu0 %1537
        %v1539 = vsel %vm471, %v1521, 0.0
        %1540 = vadd.xlane.f32.xlu0 %v1539
        %v1541 = vpop.xlane.xlu0 %1540
        %v1542 = vsel %vm471, %v1522, 0.0
        %1543 = vadd.xlane.f32.xlu0 %v1542
        %v1544 = vpop.xlane.xlu0 %1543
        %v1545 = vsel %vm471, %v1523, 0.0
        %1546 = vadd.xlane.f32.xlu0 %v1545
        %v1547 = vpop.xlane.xlu0 %1546
        %v1548 = vmul.f32 %v1526, %v496
        %v1549 = vmul.f32 %v1529, %v496
        %v1550 = vmul.f32 %v1532, %v496
        %v1551 = vmul.f32 %v1535, %v496
        %v1552 = vmul.f32 %v1538, %v496
        %v1553 = vmul.f32 %v1541, %v496
        %v1554 = vmul.f32 %v1544, %v496
        %v1555 = vmul.f32 %v1547, %v496
        %v1556 = vsub.f32 %v1516, %v1548
        %v1557 = vsub.f32 %v1517, %v1549
        %v1558 = vsub.f32 %v1518, %v1550
        %v1559 = vsub.f32 %v1519, %v1551
        %v1560 = vsub.f32 %v1520, %v1552
        %v1561 = vsub.f32 %v1521, %v1553
        %v1562 = vsub.f32 %v1522, %v1554
        %v1563 = vsub.f32 %v1523, %v1555
        %v1564 = vmul.f32 %v1556, %v1556
        %v1565 = vmul.f32 %v1557, %v1557
        %v1566 = vmul.f32 %v1558, %v1558
        %v1567 = vmul.f32 %v1559, %v1559
        %v1568 = vmul.f32 %v1560, %v1560
        %v1569 = vmul.f32 %v1561, %v1561
        %v1570 = vmul.f32 %v1562, %v1562
        %v1571 = vmul.f32 %v1563, %v1563
        %v1572 = vsel %vm471, %v1564, 0.0
        %1573 = vadd.xlane.f32.xlu0 %v1572
        %v1574 = vpop.xlane.xlu0 %1573
        %v1575 = vsel %vm471, %v1565, 0.0
        %1576 = vadd.xlane.f32.xlu0 %v1575
        %v1577 = vpop.xlane.xlu0 %1576
        %v1578 = vsel %vm471, %v1566, 0.0
        %1579 = vadd.xlane.f32.xlu0 %v1578
        %v1580 = vpop.xlane.xlu0 %1579
        %v1581 = vsel %vm471, %v1567, 0.0
        %1582 = vadd.xlane.f32.xlu0 %v1581
        %v1583 = vpop.xlane.xlu0 %1582
        %v1584 = vsel %vm471, %v1568, 0.0
        %1585 = vadd.xlane.f32.xlu0 %v1584
        %v1586 = vpop.xlane.xlu0 %1585
        %v1587 = vsel %vm471, %v1569, 0.0
        %1588 = vadd.xlane.f32.xlu0 %v1587
        %v1589 = vpop.xlane.xlu0 %1588
        %v1590 = vsel %vm471, %v1570, 0.0
        %1591 = vadd.xlane.f32.xlu0 %v1590
        %v1592 = vpop.xlane.xlu0 %1591
        %v1593 = vsel %vm471, %v1571, 0.0
        %1594 = vadd.xlane.f32.xlu0 %v1593
        %v1595 = vpop.xlane.xlu0 %1594
        %v1596 = vmul.f32 %v1574, %v496
        %v1597 = vmul.f32 %v1577, %v496
        %v1598 = vmul.f32 %v1580, %v496
        %v1599 = vmul.f32 %v1583, %v496
        %v1600 = vmul.f32 %v1586, %v496
        %v1601 = vmul.f32 %v1589, %v496
        %v1602 = vmul.f32 %v1592, %v496
        %v1603 = vmul.f32 %v1595, %v496
        %v1604 = vadd.f32 %v1596, 1e-05
        %v1605 = vadd.f32 %v1597, 1e-05
        %v1606 = vadd.f32 %v1598, 1e-05
        %v1607 = vadd.f32 %v1599, 1e-05
        %v1608 = vadd.f32 %v1600, 1e-05
        %v1609 = vadd.f32 %v1601, 1e-05
        %v1610 = vadd.f32 %v1602, 1e-05
        %v1611 = vadd.f32 %v1603, 1e-05
        %v1612 = vrsqrt.pop %v1604
        %v1613 = vrsqrt.pop %v1605
        %v1614 = vrsqrt.pop %v1606
        %v1615 = vrsqrt.pop %v1607
        %v1616 = vrsqrt.pop %v1608
        %v1617 = vrsqrt.pop %v1609
        %v1618 = vrsqrt.pop %v1610
        %v1619 = vrsqrt.pop %v1611
        %v1620 = vmul.f32 %v1556, %v1612
        %v1621 = vmul.f32 %v1557, %v1613
        %v1622 = vmul.f32 %v1558, %v1614
        %v1623 = vmul.f32 %v1559, %v1615
        %v1624 = vmul.f32 %v1560, %v1616
        %v1625 = vmul.f32 %v1561, %v1617
        %v1626 = vmul.f32 %v1562, %v1618
        %v1627 = vmul.f32 %v1563, %v1619
        %v1628 = vlaneseq
        %v1629 = vshrl.u32 %v1628, 7
        %v1630 = vsub.s32 3, %v1629
        %v1631 = vrot.slane %v470, %v1630
        %v1632 = vmul.f32 %v1620, %v1631
        %v1633 = vmul.f32 %v1621, %v1631
        %v1634 = vmul.f32 %v1622, %v1631
        %v1635 = vmul.f32 %v1623, %v1631
        %v1636 = vmul.f32 %v1624, %v1631
        %v1637 = vmul.f32 %v1625, %v1631
        %v1638 = vmul.f32 %v1626, %v1631
        %v1639 = vmul.f32 %v1627, %v1631
        %v1640 = vlaneseq
        %v1641 = vshrl.u32 %v1640, 7
        %v1642 = vsub.s32 4, %v1641
        %v1643 = vrot.slane %v470, %v1642
        %v1644 = vadd.f32 %v1632, %v1643
        %v1645 = vadd.f32 %v1633, %v1643
        %v1646 = vadd.f32 %v1634, %v1643
        %v1647 = vadd.f32 %v1635, %v1643
        %v1648 = vadd.f32 %v1636, %v1643
        %v1649 = vadd.f32 %v1637, %v1643
        %v1650 = vadd.f32 %v1638, %v1643
        %v1651 = vadd.f32 %v1639, %v1643
        %v1652 = vpack.c.bf16 %v1645, %v1644
        %v1653 = vpack.c.bf16 %v1647, %v1646
        %v1654 = vpack.c.bf16 %v1649, %v1648
        %v1655 = vpack.c.bf16 %v1651, %v1650
        %v1656 = vld [vmem:[#allocation10] sm:$0xf]
        %v1657 = vld [vmem:[#allocation10 + $0x4] sm:$0xf]
        %v1658 = vld [vmem:[#allocation10 + $0x8] sm:$0xf]
        %v1659 = vld [vmem:[#allocation10 + $0xc] sm:$0xf]
        %v1660 = vld [vmem:[%s8] sm:$0x1]
        %v1662 = vlaneseq
        %v1663 = vshrl.u32 %v1662, 7
        %v1664 = vsub.s32 0, %v1663
        %v1665 = vrot.slane %v1660, %v1664
        %v1671 = vunpack.c.l.b16 %v1656
        %v1672 = vunpack.c.l.b16 %v1657
        %v1673 = vunpack.c.l.b16 %v1658
        %v1674 = vunpack.c.l.b16 %v1659
        %v1675 = vpack.c.b16 %v1672, %v1671
        %v1676 = vpack.c.b16 %v1674, %v1673
        %v1680 = vsel %vm471, %v1652, 0
        %v1683 = vsel %vm471, %v1653, 0
        %v1686 = vsel %vm471, %v1654, 0
        %v1689 = vsel %vm471, %v1655, 0
        %1691 = vmatprep.subr.bf16.mxu0 0
        %1692 = vmatpush1.bf16.msra.mxu0 %v1675
        %1693 = vmatprep.subr.bf16.mxu0 0
        %1694 = vmatpush1.bf16.msra.mxu0 %v1676
        %1695 = vmatprep.subr.bf16.mxu0 0
        %1696 = vmatpush1.bf16.msra.mxu0 0
        %1697 = vmatprep.subr.bf16.mxu0 0
        %1698 = vmatpush1.bf16.msra.mxu0 0
        %1699 = vmatprep.subr.bf16.mxu0 0
        %1700 = vmatpush1.bf16.msra.mxu0 0
        %1701 = vmatprep.subr.bf16.mxu0 0
        %1702 = vmatpush1.bf16.msra.mxu0 0
        %1703 = vmatprep.subr.bf16.mxu0 0
        %1704 = vmatpush1.bf16.msra.mxu0 0
        %1705 = vmatprep.subr.bf16.mxu0 0
        %1706 = vmatpush1.bf16.msra.mxu0 0
        %1707 = vmatprep.subr.bf16.mxu0 0
        %1708 = vmatpush1.bf16.msra.mxu0 0
        %1709 = vmatprep.subr.bf16.mxu0 0
        %1710 = vmatpush1.bf16.msra.mxu0 0
        %1711 = vmatprep.subr.bf16.mxu0 0
        %1712 = vmatpush1.bf16.msra.mxu0 0
        %1713 = vmatprep.subr.bf16.mxu0 0
        %1714 = vmatpush1.bf16.msra.mxu0 0
        %1715 = vmatprep.subr.bf16.mxu0 0
        %1716 = vmatpush1.bf16.msra.mxu0 0
        %1717 = vmatprep.subr.bf16.mxu0 0
        %1718 = vmatpush1.bf16.msra.mxu0 0
        %1719 = vmatprep.subr.bf16.mxu0 0
        %1720 = vmatpush1.bf16.msra.mxu0 0
        %1721 = vmatprep.subr.bf16.mxu0 0
        %1722 = vmatpush1.bf16.msra.mxu0 0
        %1723 = vmatprep.mubr.bf16.mxu0 0
        %1724 = vmatmul.mubr.bf16.gmra.mrb[0].mxu0 %v1680
        %v1725 = vpop.f32.mrb[0].mxu0
        %v1726 = vadd.f32 %v1665, %v1725
        %v1727 = vpop.f32.mrb[0].mxu0
        %v1728 = vpop.f32.mrb[0].mxu0
        %v1729 = vadd.f32 %v1665, %v1728
        %v1730 = vpop.f32.mrb[0].mxu0
        %1731 = vmatprep.mubr.bf16.mxu0 0
        %1732 = vmatmul.mubr.bf16.gmra.mrb[0].mxu0 %v1683
        %v1733 = vpop.f32.mrb[0].mxu0
        %v1734 = vadd.f32 %v1665, %v1733
        %v1735 = vpop.f32.mrb[0].mxu0
        %v1736 = vpop.f32.mrb[0].mxu0
        %v1737 = vadd.f32 %v1665, %v1736
        %v1738 = vpop.f32.mrb[0].mxu0
        %1739 = vmatprep.mubr.bf16.mxu0 0
        %1740 = vmatmul.mubr.bf16.gmra.mrb[0].mxu0 %v1686
        %v1741 = vpop.f32.mrb[0].mxu0
        %v1742 = vadd.f32 %v1665, %v1741
        %v1743 = vpop.f32.mrb[0].mxu0
        %v1744 = vpop.f32.mrb[0].mxu0
        %v1745 = vadd.f32 %v1665, %v1744
        %v1746 = vpop.f32.mrb[0].mxu0
        %1747 = vmatprep.mubr.bf16.mxu0 0
        %1748 = vmatmul.mubr.bf16.gmra.mrb[0].mxu0 %v1689
        %v1749 = vpop.f32.mrb[0].mxu0
        %v1750 = vadd.f32 %v1665, %v1749
        %v1751 = vpop.f32.mrb[0].mxu0
        %v1752 = vpop.f32.mrb[0].mxu0
        %v1753 = vadd.f32 %v1665, %v1752
        %v1754 = vpop.f32.mrb[0].mxu0
        %1755 = vdwg.mxu0
        %v1756 = vmax.f32 %v1726, 0.0
        %v1757 = vmax.f32 %v1729, 0.0
        %v1758 = vmax.f32 %v1734, 0.0
        %v1759 = vmax.f32 %v1737, 0.0
        %v1760 = vmax.f32 %v1742, 0.0
        %v1761 = vmax.f32 %v1745, 0.0
        %v1762 = vmax.f32 %v1750, 0.0
        %v1763 = vmax.f32 %v1753, 0.0
        %v1764 = vpack.c.bf16 %v1757, %v1756
        %v1765 = vpack.c.bf16 %v1759, %v1758
        %v1766 = vpack.c.bf16 %v1761, %v1760
        %v1767 = vpack.c.bf16 %v1763, %v1762
        %v1768 = vld [vmem:[%s6] sm:$0xf]
        %v1769 = vld [vmem:[%s6 + $0x4] sm:$0xf]
        %v1770 = vld [vmem:[%s6 + $0x8] sm:$0xf]
        %v1771 = vld [vmem:[%s6 + $0xc] sm:$0xf]
        %v1772 = vld [vmem:[%s6 + $0x10] sm:$0xf]
        %v1773 = vld [vmem:[%s6 + $0x14] sm:$0xf]
        %v1774 = vld [vmem:[%s6 + $0x18] sm:$0xf]
        %v1775 = vld [vmem:[%s6 + $0x1c] sm:$0xf]
        %v1776 = vld [vmem:[%s6 + $0x20] sm:$0xf]
        %v1777 = vld [vmem:[%s6 + $0x24] sm:$0xf]
        %v1778 = vld [vmem:[%s6 + $0x28] sm:$0xf]
        %v1779 = vld [vmem:[%s6 + $0x2c] sm:$0xf]
        %v1780 = vld [vmem:[%s6 + $0x30] sm:$0xf]
        %v1781 = vld [vmem:[%s6 + $0x34] sm:$0xf]
        %v1782 = vld [vmem:[%s6 + $0x38] sm:$0xf]
        %v1783 = vld [vmem:[%s6 + $0x3c] sm:$0xf]
        %v1784 = vlaneseq
        %v1785 = vshrl.u32 %v1784, 7
        %v1786 = vsub.s32 5, %v1785
        %v1787 = vrot.slane %v470, %v1786
        %v1804 = vunpack.c.l.b16 %v1768
        %v1805 = vunpack.c.l.b16 %v1769
        %v1806 = vunpack.c.l.b16 %v1770
        %v1807 = vunpack.c.l.b16 %v1771
        %v1808 = vunpack.c.l.b16 %v1772
        %v1809 = vunpack.c.l.b16 %v1773
        %v1810 = vunpack.c.l.b16 %v1774
        %v1811 = vunpack.c.l.b16 %v1775
        %v1812 = vunpack.c.l.b16 %v1776
        %v1813 = vunpack.c.l.b16 %v1777
        %v1814 = vunpack.c.l.b16 %v1778
        %v1815 = vunpack.c.l.b16 %v1779
        %v1816 = vunpack.c.l.b16 %v1780
        %v1817 = vunpack.c.l.b16 %v1781
        %v1818 = vunpack.c.l.b16 %v1782
        %v1819 = vunpack.c.l.b16 %v1783
        %v1820 = vpack.c.b16 %v1805, %v1804
        %v1821 = vpack.c.b16 %v1807, %v1806
        %v1822 = vpack.c.b16 %v1809, %v1808
        %v1823 = vpack.c.b16 %v1811, %v1810
        %v1824 = vpack.c.b16 %v1813, %v1812
        %v1825 = vpack.c.b16 %v1815, %v1814
        %v1826 = vpack.c.b16 %v1817, %v1816
        %v1827 = vpack.c.b16 %v1819, %v1818
        %1836 = vmatprep.subr.bf16.mxu0 0
        %1837 = vmatpush1.bf16.msra.mxu0 %v1820
        %1838 = vmatprep.subr.bf16.mxu0 0
        %1839 = vmatpush1.bf16.msra.mxu0 %v1821
        %1840 = vmatprep.subr.bf16.mxu0 0
        %1841 = vmatpush1.bf16.msra.mxu0 %v1822
        %1842 = vmatprep.subr.bf16.mxu0 0
        %1843 = vmatpush1.bf16.msra.mxu0 %v1823
        %1844 = vmatprep.subr.bf16.mxu0 0
        %1845 = vmatpush1.bf16.msra.mxu0 %v1824
        %1846 = vmatprep.subr.bf16.mxu0 0
        %1847 = vmatpush1.bf16.msra.mxu0 %v1825
        %1848 = vmatprep.subr.bf16.mxu0 0
        %1849 = vmatpush1.bf16.msra.mxu0 %v1826
        %1850 = vmatprep.subr.bf16.mxu0 0
        %1851 = vmatpush1.bf16.msra.mxu0 %v1827
        %1852 = vmatprep.subr.bf16.mxu0 0
        %1853 = vmatpush1.bf16.msra.mxu0 0
        %1854 = vmatprep.subr.bf16.mxu0 0
        %1855 = vmatpush1.bf16.msra.mxu0 0
        %1856 = vmatprep.subr.bf16.mxu0 0
        %1857 = vmatpush1.bf16.msra.mxu0 0
        %1858 = vmatprep.subr.bf16.mxu0 0
        %1859 = vmatpush1.bf16.msra.mxu0 0
        %1860 = vmatprep.subr.bf16.mxu0 0
        %1861 = vmatpush1.bf16.msra.mxu0 0
        %1862 = vmatprep.subr.bf16.mxu0 0
        %1863 = vmatpush1.bf16.msra.mxu0 0
        %1864 = vmatprep.subr.bf16.mxu0 0
        %1865 = vmatpush1.bf16.msra.mxu0 0
        %1866 = vmatprep.subr.bf16.mxu0 0
        %1867 = vmatpush1.bf16.msra.mxu0 0
        %1868 = vmatprep.mubr.bf16.mxu0 0
        %1869 = vmatmul.mubr.bf16.gmra.mrb[0].mxu0 %v1764
        %v1870 = vpop.f32.mrb[0].mxu0
        %v1871 = vadd.f32 %v1787, %v1870
        %v1872 = vpop.f32.mrb[0].mxu0
        %v1873 = vpop.f32.mrb[0].mxu0
        %v1874 = vadd.f32 %v1787, %v1873
        %v1875 = vpop.f32.mrb[0].mxu0
        %1876 = vmatprep.mubr.bf16.mxu0 0
        %1877 = vmatmul.mubr.bf16.gmra.mrb[0].mxu0 %v1765
        %v1878 = vpop.f32.mrb[0].mxu0
        %v1879 = vadd.f32 %v1787, %v1878
        %v1880 = vpop.f32.mrb[0].mxu0
        %v1881 = vpop.f32.mrb[0].mxu0
        %v1882 = vadd.f32 %v1787, %v1881
        %v1883 = vpop.f32.mrb[0].mxu0
        %1884 = vmatprep.mubr.bf16.mxu0 0
        %1885 = vmatmul.mubr.bf16.gmra.mrb[0].mxu0 %v1766
        %v1886 = vpop.f32.mrb[0].mxu0
        %v1887 = vadd.f32 %v1787, %v1886
        %v1888 = vpop.f32.mrb[0].mxu0
        %v1889 = vpop.f32.mrb[0].mxu0
        %v1890 = vadd.f32 %v1787, %v1889
        %v1891 = vpop.f32.mrb[0].mxu0
        %1892 = vmatprep.mubr.bf16.mxu0 0
        %1893 = vmatmul.mubr.bf16.gmra.mrb[0].mxu0 %v1767
        %v1894 = vpop.f32.mrb[0].mxu0
        %v1895 = vadd.f32 %v1787, %v1894
        %v1896 = vpop.f32.mrb[0].mxu0
        %v1897 = vpop.f32.mrb[0].mxu0
        %v1898 = vadd.f32 %v1787, %v1897
        %v1899 = vpop.f32.mrb[0].mxu0
        %1900 = vdwg.mxu0
        %v1901 = vadd.f32 %v1516, %v1871
        %v1902 = vadd.f32 %v1517, %v1874
        %v1903 = vadd.f32 %v1518, %v1879
        %v1904 = vadd.f32 %v1519, %v1882
        %v1905 = vadd.f32 %v1520, %v1887
        %v1906 = vadd.f32 %v1521, %v1890
        %v1907 = vadd.f32 %v1522, %v1895
        %v1908 = vadd.f32 %v1523, %v1898
        %1909 = vst.msk [vmem:[%s453] sm:$0xff] %vm471, %v1901
        %1910 = vst.msk [vmem:[%s453 + $0x8] sm:$0xff] %vm471, %v1902
        %1911 = vst.msk [vmem:[%s453 + $0x10] sm:$0xff] %vm471, %v1903
        %1912 = vst.msk [vmem:[%s453 + $0x18] sm:$0xff] %vm471, %v1904
        %1913 = vst.msk [vmem:[%s453 + $0x20] sm:$0xff] %vm471, %v1905
        %1914 = vst.msk [vmem:[%s453 + $0x28] sm:$0xff] %vm471, %v1906
        %1915 = vst.msk [vmem:[%s453 + $0x30] sm:$0xff] %vm471, %v1907
        %1916 = vst.msk [vmem:[%s453 + $0x38] sm:$0xff] %vm471, %v1908
        %s1917 = sand.u32 %s272, 1
        %s1918 = scalar_lea.sflag [#allocation4], %s1917
        %s1919 = sand.u32 %s272, 1
        %s1920 = smul.addr %s1919, 64
        %s1921 = scalar_lea.vmem [#allocation11], %s1920
        // Predicated region
        $region85: #{block_forward.1} parent=63 // pred_check
          %p1922 = pneg %p282
        $region86: #{block_forward.1} parent=63 // pred_check_branch
          %1924 = sbr.rel (%p1922) target = $region88
        $region87: #{block_forward.1} parent=63 // pred_region
          %s1925 = smul.u32 8, %s28
          %s1927 = ssub.s32 1024, 1024
          %1928 = vsyncadd %s1918, %s1927
          %s1929 = smul.addr %s1925, 128
          %s1930 = scalar_lea.hbm %s11, %s1929
          %s1931 = sshll.u32 %s1921, 4
          %s1932 = int_to_ptr.vmem [resolvable:$true] %s1931
          %1937 = dma.vmem_to_hbm [thread:$0]  %s1932, 1024, %s1930, %s1918, 128, 128, 8
        $region88: #{block_forward.1} parent=63 // pred_fallthru
          _
      $region64: #{block_forward.1} parent=5 // pred_fallthru
        _
      %p1938 = scmp.le.s32.totalorder 2, %s23
      // Predicated region
      $region89: #{block_forward.1} parent=5 // pred_check
        %p1939 = pneg %p1938
      $region90: #{block_forward.1} parent=5 // pred_check_branch
        %1941 = sbr.rel (%p1939) target = $region92
      $region91: #{block_forward.1} parent=5 // pred_region
        %s1942 = ssub.s32 %s23, 2
        // Predicated region
        $region93: #{block_forward.1} parent=91 // pred_check
          %p1943 = pneg %p288
        $region94: #{block_forward.1} parent=91 // pred_check_branch
          %1945 = sbr.rel (%p1943) target = $region96
        $region95: #{block_forward.1} parent=91 // pred_region
          %s1946 = sand.u32 %s273, 1
          %s1947 = scalar_lea.sflag [#allocation4], %s1946
          %s1948 = sand.u32 %s273, 1
          %s1949 = smul.addr %s1948, 64
          %s1950 = scalar_lea.vmem [#allocation11], %s1949
          %1951 = dma.done %s1947, 1024
        $region96: #{block_forward.1} parent=91 // pred_fallthru
          _
      $region92: #{block_forward.1} parent=5 // pred_fallthru
        _
    $region6: #{block_forward.1} parent=1 // loop_footer
      %s27 = sadd.s32 1, %s23
    $region7: #{block_forward.1} parent=1 // loop_footer_branch
      %22 = sbr.rel target = $region3
    $region8: #{block_forward.1} parent=1 // loop_exit
      _
    %1952 = vsyncpa [#allocation3], 1
    %s1953 = scalar_lea.sflag [#allocation3], 1
    %1954 = vsyncpa %s1953, 1
    %1955 = vsyncpa [#allocation6], 1
    %1956 = vsyncpa [#allocation9], 1
    %1957 = vsyncpa [#allocation4], 1
    %s1958 = scalar_lea.sflag [#allocation4], 1
    %1959 = vsyncpa %s1958, 1

</llo_original>
